<compile_context>
chip_gen: v6e
topology: v6e:2x2x1
jax: 0.10.0
libtpu: 0.0.40
codegen_flags: <defaults>
</compile_context>

<pallas_src>
import functools

import jax
import jax.numpy as jnp
from jax.experimental import pallas as pl
from jax.experimental.pallas import tpu as pltpu

IN_FEATURES = 28 * 28          # 784
HIDDEN = 500
H_PAD = 512                    # hidden padded to a lane multiple (exact math)
CLASSES = 10
DEFAULT_TB = 2048              # batch tile; sweep 1024-2048 on big batches


def mlp_kernel(x_ref, w1_ref, b1_ref, w2_ref, b2_ref, o_ref):
    # fc1: cast x f32 -> bf16 on the VPU (hides under MXU time), f32 accumulate
    x_bf16 = x_ref[...].astype(jnp.bfloat16)                       # (tb, 784)
    h = jnp.dot(x_bf16, w1_ref[...], preferred_element_type=jnp.float32)
    h = jnp.maximum(h + b1_ref[...], 0.0)                          # (tb, 512)
    # fc2: bf16 activations into the MXU, f32 accumulate
    logits = jnp.dot(h.astype(jnp.bfloat16), w2_ref[...],
                     preferred_element_type=jnp.float32)
    logits = logits + b2_ref[...]                                  # (tb, 10)
    # numerically stable log_softmax over the class dim
    m = jnp.max(logits, axis=-1, keepdims=True)
    shifted = logits - m
    lse = jnp.log(jnp.sum(jnp.exp(shifted), axis=-1, keepdims=True))
    o_ref[...] = shifted - lse


def _round_up(n, m):
    return ((n + m - 1) // m) * m


def prepare_params(w1, b1, w2, b2):
    """One-time prep (outside hot path): transpose, pad HIDDEN->512, cast bf16.

    Padding is exact: padded b1 entries are 0, so padded h columns are
    relu(0 + 0) = 0, and those columns hit zero rows of w2t -> contribute 0.
    """
    w1t = w1.T.astype(jnp.float32)                                  # (784, 500)
    w1t = jnp.pad(w1t, ((0, 0), (0, H_PAD - HIDDEN)))               # (784, 512)
    w1t = w1t.astype(jnp.bfloat16)
    b1r = jnp.pad(b1.reshape(1, -1).astype(jnp.float32),
                  ((0, 0), (0, H_PAD - HIDDEN)))                    # (1, 512)
    w2t = jnp.pad(w2.T.astype(jnp.float32),
                  ((0, H_PAD - HIDDEN), (0, 0))).astype(jnp.bfloat16)  # (512, 10)
    b2r = b2.reshape(1, -1).astype(jnp.float32)                     # (1, 10)
    return w1t, b1r, w2t, b2r


@functools.partial(jax.jit, static_argnames=("tb",))
def full_connect_forward(x, w1t, b1r, w2t, b2r, *, tb=DEFAULT_TB):
    """x: (B, 1, 28, 28) float32 (NCHW). Params from prepare_params().
    Returns (B, 10) float32 log-probs."""
    B = x.shape[0]
    x2d = x.reshape(B, IN_FEATURES)            # stays f32; cast fused in kernel

    # Align batch to 16 rows only (not a full tile) -> at most 15 wasted rows.
    b_pad = _round_up(B, 16)
    if b_pad != B:
        x2d = jnp.pad(x2d, ((0, b_pad - B), (0, 0)))

    # Batch tile: multiple of 16, capped by the (padded) batch.
    tb = _round_up(min(tb, b_pad), 16)
    grid_n = pl.cdiv(b_pad, tb)
    # v7x megacore: keep >= 2 grid steps so both TensorCores get work when the
    # batch is big enough to be worth splitting.
    if grid_n == 1 and b_pad >= 256:
        tb = _round_up(pl.cdiv(b_pad, 2), 16)
        grid_n = pl.cdiv(b_pad, tb)

    cost = pl.CostEstimate(
        flops=2 * b_pad * IN_FEATURES * H_PAD + 2 * b_pad * H_PAD * CLASSES,
        transcendentals=b_pad * CLASSES,
        bytes_accessed=(b_pad * IN_FEATURES * 4          # x (f32, read once)
                        + IN_FEATURES * H_PAD * 2        # w1 (bf16)
                        + H_PAD * CLASSES * 2            # w2 (bf16)
                        + (H_PAD + CLASSES) * 4          # biases (f32)
                        + b_pad * CLASSES * 4),          # output (f32)
    )

    out_pad = pl.pallas_call(
        mlp_kernel,
        out_shape=jax.ShapeDtypeStruct((b_pad, CLASSES), jnp.float32),
        grid=(grid_n,),
        in_specs=[
            pl.BlockSpec((tb, IN_FEATURES), lambda i: (i, 0)),      # x tile (f32)
            pl.BlockSpec((IN_FEATURES, H_PAD), lambda i: (0, 0)),   # w1 (resident)
            pl.BlockSpec((1, H_PAD), lambda i: (0, 0)),             # b1 (resident)
            pl.BlockSpec((H_PAD, CLASSES), lambda i: (0, 0)),       # w2 (resident)
            pl.BlockSpec((1, CLASSES), lambda i: (0, 0)),           # b2 (resident)
        ],
        out_specs=pl.BlockSpec((tb, CLASSES), lambda i: (i, 0)),
        compiler_params=pltpu.CompilerParams(
            dimension_semantics=("parallel",),         # megacore over batch
            vmem_limit_bytes=48 * 1024 * 1024,         # headroom for tb=2048
        ),
        cost_estimate=cost,
    )(x2d, w1t, b1r, w2t, b2r)

    return out_pad[:B]


def init_params(key):
    """Deterministic init matching nn.Linear shapes: fc1 (500,784), fc2 (10,500)."""
    k1, k2, k3, k4 = jax.random.split(key, 4)
    bound1 = 1.0 / IN_FEATURES ** 0.5
    bound2 = 1.0 / HIDDEN ** 0.5
    w1 = jax.random.uniform(k1, (HIDDEN, IN_FEATURES), jnp.float32, -bound1, bound1)
    b1 = jax.random.uniform(k2, (HIDDEN,), jnp.float32, -bound1, bound1)
    w2 = jax.random.uniform(k3, (CLASSES, HIDDEN), jnp.float32, -bound2, bound2)
    b2 = jax.random.uniform(k4, (CLASSES,), jnp.float32, -bound2, bound2)
    return w1, b1, w2, b2


if __name__ == "__main__":
    key = jax.random.PRNGKey(0)
    kx, kp = jax.random.split(key)
    x = jax.random.normal(kx, (2, 1, 28, 28), jnp.float32)   # small batch, NCHW
    w1, b1, w2, b2 = init_params(kp)

    params = prepare_params(w1, b1, w2, b2)                  # one-time prep
    out = full_connect_forward(x, *params)
    out = jax.block_until_ready(out)

    # reference (pure JAX, f32) — loose tolerance since GEMM inputs are bf16
    x2d = x.reshape(-1, IN_FEATURES)
    h_ref = jnp.maximum(x2d @ w1.T + b1, 0.0)
    ref = jax.nn.log_softmax(h_ref @ w2.T + b2, axis=-1)

    probs_sum = jnp.sum(jnp.exp(out), axis=1)
    assert out.shape == (2, CLASSES)
    assert bool(jnp.all(jnp.abs(probs_sum - 1.0) < 1e-4))
    assert bool(jnp.max(jnp.abs(out - ref)) < 5e-2)
    print("KERNEL_OK")
</pallas_src>

<mosaic_0001>
module attributes {stable_mosaic.version = 11 : i64} {
  func.func @mlp_kernel(%arg0: i32, %arg1: memref<16x784xf32, #tpu.memory_space<vmem>>, %arg2: memref<784x512xbf16, #tpu.memory_space<vmem>>, %arg3: memref<1x512xf32, #tpu.memory_space<vmem>>, %arg4: memref<512x10xbf16, #tpu.memory_space<vmem>>, %arg5: memref<1x10xf32, #tpu.memory_space<vmem>>, %arg6: memref<16x10xf32, #tpu.memory_space<vmem>>) attributes {dimension_semantics = [#tpu.dimension_semantics<parallel>], iteration_bounds = array<i64: 1>, scalar_prefetch = 0 : i64, scratch_operands = 0 : i64, tpu.core_type = #tpu.core_type<tc>, window_params = [{transform_indices = @transform_0, window_bounds = array<i64: 16, 784>}, {pipeline_mode = #tpu.pipeline_mode<synchronous>, transform_indices = @transform_1, window_bounds = array<i64: 784, 512>}, {pipeline_mode = #tpu.pipeline_mode<synchronous>, transform_indices = @transform_2, window_bounds = array<i64: 1, 512>}, {pipeline_mode = #tpu.pipeline_mode<synchronous>, transform_indices = @transform_3, window_bounds = array<i64: 512, 10>}, {pipeline_mode = #tpu.pipeline_mode<synchronous>, transform_indices = @transform_4, window_bounds = array<i64: 1, 10>}, {transform_indices = @transform_5, window_bounds = array<i64: 16, 10>}]} {
    %c0 = arith.constant 0 : index
    %c0_0 = arith.constant 0 : index
    %0 = vector.load %arg1[%c0, %c0_0] : memref<16x784xf32, #tpu.memory_space<vmem>>, vector<16x784xf32>
    %1 = arith.truncf %0 : vector<16x784xf32> to vector<16x784xbf16>
    %c0_1 = arith.constant 0 : index
    %c0_2 = arith.constant 0 : index
    %2 = vector.load %arg2[%c0_1, %c0_2] : memref<784x512xbf16, #tpu.memory_space<vmem>>, vector<784x512xbf16>
    %cst = arith.constant dense<0.000000e+00> : vector<16x512xf32>
    %3 = tpu.matmul %1, %2, %cst {dimension_numbers = #tpu.dot_dimension_numbers<[1], [0], [0], [1], [0, 0, 1, 1], [], []>} : vector<16x784xbf16>, vector<784x512xbf16>, vector<16x512xf32> -> vector<16x512xf32>
    %c0_3 = arith.constant 0 : index
    %c0_4 = arith.constant 0 : index
    %4 = vector.load %arg3[%c0_3, %c0_4] : memref<1x512xf32, #tpu.memory_space<vmem>>, vector<1x512xf32>
    %5 = vector.broadcast %4 : vector<1x512xf32> to vector<16x512xf32>
    %6 = arith.addf %3, %5 : vector<16x512xf32>
    %cst_5 = arith.constant 0.000000e+00 : f32
    %7 = vector.broadcast %cst_5 : f32 to vector<16x512xf32>
    %8 = arith.maximumf %6, %7 : vector<16x512xf32>
    %9 = arith.truncf %8 : vector<16x512xf32> to vector<16x512xbf16>
    %c0_6 = arith.constant 0 : index
    %c0_7 = arith.constant 0 : index
    %10 = vector.load %arg4[%c0_6, %c0_7] : memref<512x10xbf16, #tpu.memory_space<vmem>>, vector<512x10xbf16>
    %cst_8 = arith.constant dense<0.000000e+00> : vector<16x10xf32>
    %11 = tpu.matmul %9, %10, %cst_8 {dimension_numbers = #tpu.dot_dimension_numbers<[1], [0], [0], [1], [0, 0, 1, 1], [], []>} : vector<16x512xbf16>, vector<512x10xbf16>, vector<16x10xf32> -> vector<16x10xf32>
    %c0_9 = arith.constant 0 : index
    %c0_10 = arith.constant 0 : index
    %12 = vector.load %arg5[%c0_9, %c0_10] : memref<1x10xf32, #tpu.memory_space<vmem>>, vector<1x10xf32>
    %13 = vector.broadcast %12 : vector<1x10xf32> to vector<16x10xf32>
    %14 = arith.addf %11, %13 : vector<16x10xf32>
    %cst_11 = arith.constant dense<0xFF800000> : vector<16xf32>
    %15 = vector.multi_reduction <maximumf>, %14, %cst_11 [1] : vector<16x10xf32> to vector<16xf32>
    %16 = vector.shape_cast %15 : vector<16xf32> to vector<16x1xf32>
    %17 = vector.broadcast %16 : vector<16x1xf32> to vector<16x10xf32>
    %18 = arith.subf %14, %17 : vector<16x10xf32>
    %19 = math.exp %18 : vector<16x10xf32>
    %cst_12 = arith.constant dense<0.000000e+00> : vector<16xf32>
    %20 = vector.multi_reduction <add>, %19, %cst_12 [1] : vector<16x10xf32> to vector<16xf32>
    %21 = vector.shape_cast %20 : vector<16xf32> to vector<16x1xf32>
    %22 = math.log %21 : vector<16x1xf32>
    %23 = vector.broadcast %22 : vector<16x1xf32> to vector<16x10xf32>
    %24 = arith.subf %18, %23 : vector<16x10xf32>
    %c0_13 = arith.constant 0 : index
    %c0_14 = arith.constant 0 : index
    %25 = vector.load %arg6[%c0_13, %c0_14] : memref<16x10xf32, #tpu.memory_space<vmem>>, vector<16x10xf32>
    tpu.vector_store %arg6[%c0_13, %c0_14], %24 {strides = array<i32>} : memref<16x10xf32, #tpu.memory_space<vmem>>, vector<16x10xf32>,
    return
  }
  func.func @transform_0(%arg0: i32) -> (i32, i32) {
    %c0_i32 = arith.constant 0 : i32
    %c0_i32_0 = arith.constant 0 : i32
    return %arg0, %c0_i32 : i32, i32
  }
  func.func @transform_1(%arg0: i32) -> (i32, i32) {
    %c0_i32 = arith.constant 0 : i32
    %c0_i32_0 = arith.constant 0 : i32
    %c0_i32_1 = arith.constant 0 : i32
    return %c0_i32, %c0_i32_0 : i32, i32
  }
  func.func @transform_2(%arg0: i32) -> (i32, i32) {
    %c0_i32 = arith.constant 0 : i32
    %c0_i32_0 = arith.constant 0 : i32
    %c0_i32_1 = arith.constant 0 : i32
    return %c0_i32, %c0_i32_0 : i32, i32
  }
  func.func @transform_3(%arg0: i32) -> (i32, i32) {
    %c0_i32 = arith.constant 0 : i32
    %c0_i32_0 = arith.constant 0 : i32
    %c0_i32_1 = arith.constant 0 : i32
    return %c0_i32, %c0_i32_0 : i32, i32
  }
  func.func @transform_4(%arg0: i32) -> (i32, i32) {
    %c0_i32 = arith.constant 0 : i32
    %c0_i32_0 = arith.constant 0 : i32
    %c0_i32_1 = arith.constant 0 : i32
    return %c0_i32, %c0_i32_0 : i32, i32
  }
  func.func @transform_5(%arg0: i32) -> (i32, i32) {
    %c0_i32 = arith.constant 0 : i32
    %c0_i32_0 = arith.constant 0 : i32
    return %arg0, %c0_i32 : i32, i32
  }
}

</mosaic_0001>

<llo_original>
// kernel: full_connect_forward.1
$region0: #{full_connect_forward.1}
  #allocation0 [shape = 'u32[]', space=smem, size = 0x4, offset = 0x4, fixed_abs, tag = 'smem constant byte address 0x4 - core index']
  #allocation1 [shape = 'u32[144,128]{1,0:T(1,128)}', space=vmem, size = 0x12000, scoped, tag = 'internal scratch']
  %s0 = inlined_call_operand.vmem [shape: f32[16,784], index: 0, kind: input, shape index: {}]
  %s1 = inlined_call_operand.hbm [shape: bf16[784,512], index: 1, kind: input, shape index: {}]
  %s2 = inlined_call_operand.vmem [shape: f32[1,512], index: 2, kind: input, shape index: {}]
  %s3 = inlined_call_operand.vmem [shape: bf16[512,10], index: 3, kind: input, shape index: {}]
  %s4 = inlined_call_operand.vmem [shape: f32[1,10], index: 4, kind: input, shape index: {}]
  %s5 = inlined_call_operand.vmem [shape: f32[16,10], index: 5, kind: output, shape index: {}]
  %s6 = sld [smem:[#allocation0]]
  $region34: #{full_connect_forward.1} parent=0
    _
  %s8 = ssub.s32 1, %s6
  %s9 = scalar_select 0, %s8, %s6
  $region1: #{full_connect_forward.1} parent=0
    #allocation2 [shape = 'u8[802816]{0}', space=vmem, size = 0xc4000, scoped, tag = 'input window, operand 1, single buffered']
    #allocation3 [shape = 's32[1]{0}', space=sflag, size = 0x4, scoped, tag = 'scoped memory for full_connect_forward.1']
    %10 = vsyncpa [#allocation3], 0
    // Predicated region
    $region2: #{full_connect_forward.1} parent=1 // pred_check
      _
    $region3: #{full_connect_forward.1} parent=1 // pred_check_branch
      %12 = sbr.rel (0) target = $region5
    $region4: #{full_connect_forward.1} parent=1 // pred_region
      _
    $region5: #{full_connect_forward.1} parent=1 // pred_fallthru
      _
    // Predicated region
    $region6: #{full_connect_forward.1} parent=1 // pred_check
      _
    $region7: #{full_connect_forward.1} parent=1 // pred_check_branch
      %14 = sbr.rel (0) target = $region9
    $region8: #{full_connect_forward.1} parent=1 // pred_region
      %s16 = ssub.s32 25088, 25088
      %17 = vsyncadd [#allocation3], %s16
      %s18 = sshll.u32 [#allocation2], 4
      %s19 = int_to_ptr.vmem [resolvable:$true] %s18
      %24 = dma.hbm_to_vmem [thread:$0]  %s1, 25088, %s19, [#allocation3], 256, 256, 16
    $region9: #{full_connect_forward.1} parent=1 // pred_fallthru
      _
    // Predicated region
    $region10: #{full_connect_forward.1} parent=1 // pred_check
      _
    $region11: #{full_connect_forward.1} parent=1 // pred_check_branch
      %26 = sbr.rel (0) target = $region13
    $region12: #{full_connect_forward.1} parent=1 // pred_region
      _
    $region13: #{full_connect_forward.1} parent=1 // pred_fallthru
      _
    // Predicated region
    $region14: #{full_connect_forward.1} parent=1 // pred_check
      _
    $region15: #{full_connect_forward.1} parent=1 // pred_check_branch
      %28 = sbr.rel (0) target = $region17
    $region16: #{full_connect_forward.1} parent=1 // pred_region
      _
    $region17: #{full_connect_forward.1} parent=1 // pred_fallthru
      _
    // Predicated region
    $region18: #{full_connect_forward.1} parent=1 // pred_check
      _
    $region19: #{full_connect_forward.1} parent=1 // pred_check_branch
      %30 = sbr.rel (0) target = $region21
    $region20: #{full_connect_forward.1} parent=1 // pred_region
      _
    $region21: #{full_connect_forward.1} parent=1 // pred_fallthru
      _
    // Predicated region
    $region22: #{full_connect_forward.1} parent=1 // pred_check
      _
    $region23: #{full_connect_forward.1} parent=1 // pred_check_branch
      %32 = sbr.rel (0) target = $region25
    $region24: #{full_connect_forward.1} parent=1 // pred_region
      %33 = dma.done [#allocation3], 25088
    $region25: #{full_connect_forward.1} parent=1 // pred_fallthru
      _
    %v35 = vld [vmem:[%s0] sm:$0xff]
    %v36 = vld [vmem:[%s0 + $0x8] sm:$0xff]
    %v37 = vld [vmem:[%s0 + $0x10] sm:$0xff]
    %v38 = vld [vmem:[%s0 + $0x18] sm:$0xff]
    %v39 = vld [vmem:[%s0 + $0x20] sm:$0xff]
    %v40 = vld [vmem:[%s0 + $0x28] sm:$0xff]
    %v41 = vld [vmem:[%s0 + $0x30] sm:$0xff]
    %v42 = vld [vmem:[%s0 + $0x38] sm:$0xff]
    %v43 = vld [vmem:[%s0 + $0x40] sm:$0xff]
    %v44 = vld [vmem:[%s0 + $0x48] sm:$0xff]
    %v45 = vld [vmem:[%s0 + $0x50] sm:$0xff]
    %v46 = vld [vmem:[%s0 + $0x58] sm:$0xff]
    %v47 = vld [vmem:[%s0 + $0x60] sm:$0xff]
    %v48 = vld [vmem:[%s0 + $0x68] sm:$0xff]
    %v49 = vpack.c.bf16 %v42, %v35
    %v50 = vpack.c.bf16 %v43, %v36
    %v51 = vpack.c.bf16 %v44, %v37
    %v52 = vpack.c.bf16 %v45, %v38
    %v53 = vpack.c.bf16 %v46, %v39
    %v54 = vpack.c.bf16 %v47, %v40
    %v55 = vpack.c.bf16 %v48, %v41
    %v56 = vld [vmem:[#allocation2] sm:$0xff]
    %v57 = vld [vmem:[#allocation2 + $0x8] sm:$0xff]
    %v58 = vld [vmem:[#allocation2 + $0x10] sm:$0xff]
    %v59 = vld [vmem:[#allocation2 + $0x18] sm:$0xff]
    %v60 = vld [vmem:[#allocation2 + $0x20] sm:$0xff]
    %v61 = vld [vmem:[#allocation2 + $0x28] sm:$0xff]
    %v62 = vld [vmem:[#allocation2 + $0x30] sm:$0xff]
    %v63 = vld [vmem:[#allocation2 + $0x38] sm:$0xff]
    %v64 = vld [vmem:[#allocation2 + $0x40] sm:$0xff]
    %v65 = vld [vmem:[#allocation2 + $0x48] sm:$0xff]
    %v66 = vld [vmem:[#allocation2 + $0x50] sm:$0xff]
    %v67 = vld [vmem:[#allocation2 + $0x58] sm:$0xff]
    %v68 = vld [vmem:[#allocation2 + $0x60] sm:$0xff]
    %v69 = vld [vmem:[#allocation2 + $0x68] sm:$0xff]
    %v70 = vld [vmem:[#allocation2 + $0x70] sm:$0xff]
    %v71 = vld [vmem:[#allocation2 + $0x78] sm:$0xff]
    %v72 = vld [vmem:[#allocation2 + $0x80] sm:$0xff]
    %v73 = vld [vmem:[#allocation2 + $0x88] sm:$0xff]
    %v74 = vld [vmem:[#allocation2 + $0x90] sm:$0xff]
    %v75 = vld [vmem:[#allocation2 + $0x98] sm:$0xff]
    %v76 = vld [vmem:[#allocation2 + $0xa0] sm:$0xff]
    %v77 = vld [vmem:[#allocation2 + $0xa8] sm:$0xff]
    %v78 = vld [vmem:[#allocation2 + $0xb0] sm:$0xff]
    %v79 = vld [vmem:[#allocation2 + $0xb8] sm:$0xff]
    %v80 = vld [vmem:[#allocation2 + $0xc0] sm:$0xff]
    %v81 = vld [vmem:[#allocation2 + $0xc8] sm:$0xff]
    %v82 = vld [vmem:[#allocation2 + $0xd0] sm:$0xff]
    %v83 = vld [vmem:[#allocation2 + $0xd8] sm:$0xff]
    %v84 = vld [vmem:[#allocation2 + $0xe0] sm:$0xff]
    %v85 = vld [vmem:[#allocation2 + $0xe8] sm:$0xff]
    %v86 = vld [vmem:[#allocation2 + $0xf0] sm:$0xff]
    %v87 = vld [vmem:[#allocation2 + $0xf8] sm:$0xff]
    %v88 = vld [vmem:[#allocation2 + $0x100] sm:$0xff]
    %v89 = vld [vmem:[#allocation2 + $0x108] sm:$0xff]
    %v90 = vld [vmem:[#allocation2 + $0x110] sm:$0xff]
    %v91 = vld [vmem:[#allocation2 + $0x118] sm:$0xff]
    %v92 = vld [vmem:[#allocation2 + $0x120] sm:$0xff]
    %v93 = vld [vmem:[#allocation2 + $0x128] sm:$0xff]
    %v94 = vld [vmem:[#allocation2 + $0x130] sm:$0xff]
    %v95 = vld [vmem:[#allocation2 + $0x138] sm:$0xff]
    %v96 = vld [vmem:[#allocation2 + $0x140] sm:$0xff]
    %v97 = vld [vmem:[#allocation2 + $0x148] sm:$0xff]
    %v98 = vld [vmem:[#allocation2 + $0x150] sm:$0xff]
    %v99 = vld [vmem:[#allocation2 + $0x158] sm:$0xff]
    %v100 = vld [vmem:[#allocation2 + $0x160] sm:$0xff]
    %v101 = vld [vmem:[#allocation2 + $0x168] sm:$0xff]
    %v102 = vld [vmem:[#allocation2 + $0x170] sm:$0xff]
    %v103 = vld [vmem:[#allocation2 + $0x178] sm:$0xff]
    %v104 = vld [vmem:[#allocation2 + $0x180] sm:$0xff]
    %v105 = vld [vmem:[#allocation2 + $0x188] sm:$0xff]
    %v106 = vld [vmem:[#allocation2 + $0x190] sm:$0xff]
    %v107 = vld [vmem:[#allocation2 + $0x198] sm:$0xff]
    %v108 = vld [vmem:[#allocation2 + $0x1a0] sm:$0xff]
    %v109 = vld [vmem:[#allocation2 + $0x1a8] sm:$0xff]
    %v110 = vld [vmem:[#allocation2 + $0x1b0] sm:$0xff]
    %v111 = vld [vmem:[#allocation2 + $0x1b8] sm:$0xff]
    %v112 = vld [vmem:[#allocation2 + $0x1c0] sm:$0xff]
    %v113 = vld [vmem:[#allocation2 + $0x1c8] sm:$0xff]
    %v114 = vld [vmem:[#allocation2 + $0x1d0] sm:$0xff]
    %v115 = vld [vmem:[#allocation2 + $0x1d8] sm:$0xff]
    %v116 = vld [vmem:[#allocation2 + $0x1e0] sm:$0xff]
    %v117 = vld [vmem:[#allocation2 + $0x1e8] sm:$0xff]
    %v118 = vld [vmem:[#allocation2 + $0x1f0] sm:$0xff]
    %v119 = vld [vmem:[#allocation2 + $0x1f8] sm:$0xff]
    %v120 = vld [vmem:[#allocation2 + $0x200] sm:$0xff]
    %v121 = vld [vmem:[#allocation2 + $0x208] sm:$0xff]
    %v122 = vld [vmem:[#allocation2 + $0x210] sm:$0xff]
    %v123 = vld [vmem:[#allocation2 + $0x218] sm:$0xff]
    %v124 = vld [vmem:[#allocation2 + $0x220] sm:$0xff]
    %v125 = vld [vmem:[#allocation2 + $0x228] sm:$0xff]
    %v126 = vld [vmem:[#allocation2 + $0x230] sm:$0xff]
    %v127 = vld [vmem:[#allocation2 + $0x238] sm:$0xff]
    %v128 = vld [vmem:[#allocation2 + $0x240] sm:$0xff]
    %v129 = vld [vmem:[#allocation2 + $0x248] sm:$0xff]
    %v130 = vld [vmem:[#allocation2 + $0x250] sm:$0xff]
    %v131 = vld [vmem:[#allocation2 + $0x258] sm:$0xff]
    %v132 = vld [vmem:[#allocation2 + $0x260] sm:$0xff]
    %v133 = vld [vmem:[#allocation2 + $0x268] sm:$0xff]
    %v134 = vld [vmem:[#allocation2 + $0x270] sm:$0xff]
    %v135 = vld [vmem:[#allocation2 + $0x278] sm:$0xff]
    %v136 = vld [vmem:[#allocation2 + $0x280] sm:$0xff]
    %v137 = vld [vmem:[#allocation2 + $0x288] sm:$0xff]
    %v138 = vld [vmem:[#allocation2 + $0x290] sm:$0xff]
    %v139 = vld [vmem:[#allocation2 + $0x298] sm:$0xff]
    %v140 = vld [vmem:[#allocation2 + $0x2a0] sm:$0xff]
    %v141 = vld [vmem:[#allocation2 + $0x2a8] sm:$0xff]
    %v142 = vld [vmem:[#allocation2 + $0x2b0] sm:$0xff]
    %v143 = vld [vmem:[#allocation2 + $0x2b8] sm:$0xff]
    %v144 = vld [vmem:[#allocation2 + $0x2c0] sm:$0xff]
    %v145 = vld [vmem:[#allocation2 + $0x2c8] sm:$0xff]
    %v146 = vld [vmem:[#allocation2 + $0x2d0] sm:$0xff]
    %v147 = vld [vmem:[#allocation2 + $0x2d8] sm:$0xff]
    %v148 = vld [vmem:[#allocation2 + $0x2e0] sm:$0xff]
    %v149 = vld [vmem:[#allocation2 + $0x2e8] sm:$0xff]
    %v150 = vld [vmem:[#allocation2 + $0x2f0] sm:$0xff]
    %v151 = vld [vmem:[#allocation2 + $0x2f8] sm:$0xff]
    %v152 = vld [vmem:[#allocation2 + $0x300] sm:$0xff]
    %v153 = vld [vmem:[#allocation2 + $0x308] sm:$0xff]
    %v154 = vld [vmem:[#allocation2 + $0x310] sm:$0xff]
    %v155 = vld [vmem:[#allocation2 + $0x318] sm:$0xff]
    %v156 = vld [vmem:[#allocation2 + $0x320] sm:$0xff]
    %v157 = vld [vmem:[#allocation2 + $0x328] sm:$0xff]
    %v158 = vld [vmem:[#allocation2 + $0x330] sm:$0xff]
    %v159 = vld [vmem:[#allocation2 + $0x338] sm:$0xff]
    %v160 = vld [vmem:[#allocation2 + $0x340] sm:$0xff]
    %v161 = vld [vmem:[#allocation2 + $0x348] sm:$0xff]
    %v162 = vld [vmem:[#allocation2 + $0x350] sm:$0xff]
    %v163 = vld [vmem:[#allocation2 + $0x358] sm:$0xff]
    %v164 = vld [vmem:[#allocation2 + $0x360] sm:$0xff]
    %v165 = vld [vmem:[#allocation2 + $0x368] sm:$0xff]
    %v166 = vld [vmem:[#allocation2 + $0x370] sm:$0xff]
    %v167 = vld [vmem:[#allocation2 + $0x378] sm:$0xff]
    %v168 = vld [vmem:[#allocation2 + $0x380] sm:$0xff]
    %v169 = vld [vmem:[#allocation2 + $0x388] sm:$0xff]
    %v170 = vld [vmem:[#allocation2 + $0x390] sm:$0xff]
    %v171 = vld [vmem:[#allocation2 + $0x398] sm:$0xff]
    %v172 = vld [vmem:[#allocation2 + $0x3a0] sm:$0xff]
    %v173 = vld [vmem:[#allocation2 + $0x3a8] sm:$0xff]
    %v174 = vld [vmem:[#allocation2 + $0x3b0] sm:$0xff]
    %v175 = vld [vmem:[#allocation2 + $0x3b8] sm:$0xff]
    %v176 = vld [vmem:[#allocation2 + $0x3c0] sm:$0xff]
    %v177 = vld [vmem:[#allocation2 + $0x3c8] sm:$0xff]
    %v178 = vld [vmem:[#allocation2 + $0x3d0] sm:$0xff]
    %v179 = vld [vmem:[#allocation2 + $0x3d8] sm:$0xff]
    %v180 = vld [vmem:[#allocation2 + $0x3e0] sm:$0xff]
    %v181 = vld [vmem:[#allocation2 + $0x3e8] sm:$0xff]
    %v182 = vld [vmem:[#allocation2 + $0x3f0] sm:$0xff]
    %v183 = vld [vmem:[#allocation2 + $0x3f8] sm:$0xff]
    %v184 = vld [vmem:[#allocation2 + $0x400] sm:$0xff]
    %v185 = vld [vmem:[#allocation2 + $0x408] sm:$0xff]
    %v186 = vld [vmem:[#allocation2 + $0x410] sm:$0xff]
    %v187 = vld [vmem:[#allocation2 + $0x418] sm:$0xff]
    %v188 = vld [vmem:[#allocation2 + $0x420] sm:$0xff]
    %v189 = vld [vmem:[#allocation2 + $0x428] sm:$0xff]
    %v190 = vld [vmem:[#allocation2 + $0x430] sm:$0xff]
    %v191 = vld [vmem:[#allocation2 + $0x438] sm:$0xff]
    %v192 = vld [vmem:[#allocation2 + $0x440] sm:$0xff]
    %v193 = vld [vmem:[#allocation2 + $0x448] sm:$0xff]
    %v194 = vld [vmem:[#allocation2 + $0x450] sm:$0xff]
    %v195 = vld [vmem:[#allocation2 + $0x458] sm:$0xff]
    %v196 = vld [vmem:[#allocation2 + $0x460] sm:$0xff]
    %v197 = vld [vmem:[#allocation2 + $0x468] sm:$0xff]
    %v198 = vld [vmem:[#allocation2 + $0x470] sm:$0xff]
    %v199 = vld [vmem:[#allocation2 + $0x478] sm:$0xff]
    %v200 = vld [vmem:[#allocation2 + $0x480] sm:$0xff]
    %v201 = vld [vmem:[#allocation2 + $0x488] sm:$0xff]
    %v202 = vld [vmem:[#allocation2 + $0x490] sm:$0xff]
    %v203 = vld [vmem:[#allocation2 + $0x498] sm:$0xff]
    %v204 = vld [vmem:[#allocation2 + $0x4a0] sm:$0xff]
    %v205 = vld [vmem:[#allocation2 + $0x4a8] sm:$0xff]
    %v206 = vld [vmem:[#allocation2 + $0x4b0] sm:$0xff]
    %v207 = vld [vmem:[#allocation2 + $0x4b8] sm:$0xff]
    %v208 = vld [vmem:[#allocation2 + $0x4c0] sm:$0xff]
    %v209 = vld [vmem:[#allocation2 + $0x4c8] sm:$0xff]
    %v210 = vld [vmem:[#allocation2 + $0x4d0] sm:$0xff]
    %v211 = vld [vmem:[#allocation2 + $0x4d8] sm:$0xff]
    %v212 = vld [vmem:[#allocation2 + $0x4e0] sm:$0xff]
    %v213 = vld [vmem:[#allocation2 + $0x4e8] sm:$0xff]
    %v214 = vld [vmem:[#allocation2 + $0x4f0] sm:$0xff]
    %v215 = vld [vmem:[#allocation2 + $0x4f8] sm:$0xff]
    %v216 = vld [vmem:[#allocation2 + $0x500] sm:$0xff]
    %v217 = vld [vmem:[#allocation2 + $0x508] sm:$0xff]
    %v218 = vld [vmem:[#allocation2 + $0x510] sm:$0xff]
    %v219 = vld [vmem:[#allocation2 + $0x518] sm:$0xff]
    %v220 = vld [vmem:[#allocation2 + $0x520] sm:$0xff]
    %v221 = vld [vmem:[#allocation2 + $0x528] sm:$0xff]
    %v222 = vld [vmem:[#allocation2 + $0x530] sm:$0xff]
    %v223 = vld [vmem:[#allocation2 + $0x538] sm:$0xff]
    %v224 = vld [vmem:[#allocation2 + $0x540] sm:$0xff]
    %v225 = vld [vmem:[#allocation2 + $0x548] sm:$0xff]
    %v226 = vld [vmem:[#allocation2 + $0x550] sm:$0xff]
    %v227 = vld [vmem:[#allocation2 + $0x558] sm:$0xff]
    %v228 = vld [vmem:[#allocation2 + $0x560] sm:$0xff]
    %v229 = vld [vmem:[#allocation2 + $0x568] sm:$0xff]
    %v230 = vld [vmem:[#allocation2 + $0x570] sm:$0xff]
    %v231 = vld [vmem:[#allocation2 + $0x578] sm:$0xff]
    %v232 = vld [vmem:[#allocation2 + $0x580] sm:$0xff]
    %v233 = vld [vmem:[#allocation2 + $0x588] sm:$0xff]
    %v234 = vld [vmem:[#allocation2 + $0x590] sm:$0xff]
    %v235 = vld [vmem:[#allocation2 + $0x598] sm:$0xff]
    %v236 = vld [vmem:[#allocation2 + $0x5a0] sm:$0xff]
    %v237 = vld [vmem:[#allocation2 + $0x5a8] sm:$0xff]
    %v238 = vld [vmem:[#allocation2 + $0x5b0] sm:$0xff]
    %v239 = vld [vmem:[#allocation2 + $0x5b8] sm:$0xff]
    %v240 = vld [vmem:[#allocation2 + $0x5c0] sm:$0xff]
    %v241 = vld [vmem:[#allocation2 + $0x5c8] sm:$0xff]
    %v242 = vld [vmem:[#allocation2 + $0x5d0] sm:$0xff]
    %v243 = vld [vmem:[#allocation2 + $0x5d8] sm:$0xff]
    %v244 = vld [vmem:[#allocation2 + $0x5e0] sm:$0xff]
    %v245 = vld [vmem:[#allocation2 + $0x5e8] sm:$0xff]
    %v246 = vld [vmem:[#allocation2 + $0x5f0] sm:$0xff]
    %v247 = vld [vmem:[#allocation2 + $0x5f8] sm:$0xff]
    %v248 = vld [vmem:[#allocation2 + $0x600] sm:$0xff]
    %v249 = vld [vmem:[#allocation2 + $0x608] sm:$0xff]
    %v250 = vld [vmem:[#allocation2 + $0x610] sm:$0xff]
    %v251 = vld [vmem:[#allocation2 + $0x618] sm:$0xff]
    %v252 = vld [vmem:[%s2] sm:$0xf]
    %v254 = vlaneseq
    %v255 = vshrl.u32 %v254, 7
    %v256 = vsub.s32 0, %v255
    %v257 = vrot.slane %v252, %v256
    %v258 = vlaneseq
    %v259 = vshrl.u32 %v258, 7
    %v260 = vsub.s32 1, %v259
    %v261 = vrot.slane %v252, %v260
    %v262 = vlaneseq
    %v263 = vshrl.u32 %v262, 7
    %v264 = vsub.s32 2, %v263
    %v265 = vrot.slane %v252, %v264
    %v266 = vlaneseq
    %v267 = vshrl.u32 %v266, 7
    %v268 = vsub.s32 3, %v267
    %v269 = vrot.slane %v252, %v268
    %v470 = vunpack.c.l.b16 %v56
    %v471 = vunpack.c.h.b16 %v56
    %v472 = vunpack.c.l.b16 %v57
    %v473 = vunpack.c.h.b16 %v57
    %v474 = vunpack.c.l.b16 %v58
    %v475 = vunpack.c.h.b16 %v58
    %v476 = vunpack.c.l.b16 %v59
    %v477 = vunpack.c.h.b16 %v59
    %v478 = vunpack.c.l.b16 %v60
    %v479 = vunpack.c.h.b16 %v60
    %v480 = vunpack.c.l.b16 %v61
    %v481 = vunpack.c.h.b16 %v61
    %v482 = vunpack.c.l.b16 %v62
    %v483 = vunpack.c.h.b16 %v62
    %v484 = vunpack.c.l.b16 %v63
    %v485 = vunpack.c.h.b16 %v63
    %v486 = vunpack.c.l.b16 %v64
    %v487 = vunpack.c.h.b16 %v64
    %v488 = vunpack.c.l.b16 %v65
    %v489 = vunpack.c.h.b16 %v65
    %v490 = vunpack.c.l.b16 %v66
    %v491 = vunpack.c.h.b16 %v66
    %v492 = vunpack.c.l.b16 %v67
    %v493 = vunpack.c.h.b16 %v67
    %v494 = vunpack.c.l.b16 %v68
    %v495 = vunpack.c.h.b16 %v68
    %v496 = vunpack.c.l.b16 %v69
    %v497 = vunpack.c.h.b16 %v69
    %v498 = vunpack.c.l.b16 %v70
    %v499 = vunpack.c.h.b16 %v70
    %v500 = vunpack.c.l.b16 %v71
    %v501 = vunpack.c.h.b16 %v71
    %v502 = vunpack.c.l.b16 %v72
    %v503 = vunpack.c.h.b16 %v72
    %v504 = vunpack.c.l.b16 %v73
    %v505 = vunpack.c.h.b16 %v73
    %v506 = vunpack.c.l.b16 %v74
    %v507 = vunpack.c.h.b16 %v74
    %v508 = vunpack.c.l.b16 %v75
    %v509 = vunpack.c.h.b16 %v75
    %v510 = vunpack.c.l.b16 %v76
    %v511 = vunpack.c.h.b16 %v76
    %v512 = vunpack.c.l.b16 %v77
    %v513 = vunpack.c.h.b16 %v77
    %v514 = vunpack.c.l.b16 %v78
    %v515 = vunpack.c.h.b16 %v78
    %v516 = vunpack.c.l.b16 %v79
    %v517 = vunpack.c.h.b16 %v79
    %v518 = vunpack.c.l.b16 %v80
    %v519 = vunpack.c.h.b16 %v80
    %v520 = vunpack.c.l.b16 %v81
    %v521 = vunpack.c.h.b16 %v81
    %v522 = vunpack.c.l.b16 %v82
    %v523 = vunpack.c.h.b16 %v82
    %v524 = vunpack.c.l.b16 %v83
    %v525 = vunpack.c.h.b16 %v83
    %v526 = vunpack.c.l.b16 %v84
    %v527 = vunpack.c.h.b16 %v84
    %v528 = vunpack.c.l.b16 %v85
    %v529 = vunpack.c.h.b16 %v85
    %v530 = vunpack.c.l.b16 %v86
    %v531 = vunpack.c.h.b16 %v86
    %v532 = vunpack.c.l.b16 %v87
    %v533 = vunpack.c.h.b16 %v87
    %v534 = vunpack.c.l.b16 %v88
    %v535 = vunpack.c.h.b16 %v88
    %v536 = vunpack.c.l.b16 %v89
    %v537 = vunpack.c.h.b16 %v89
    %v538 = vunpack.c.l.b16 %v90
    %v539 = vunpack.c.h.b16 %v90
    %v540 = vunpack.c.l.b16 %v91
    %v541 = vunpack.c.h.b16 %v91
    %v542 = vunpack.c.l.b16 %v92
    %v543 = vunpack.c.h.b16 %v92
    %v544 = vunpack.c.l.b16 %v93
    %v545 = vunpack.c.h.b16 %v93
    %v546 = vunpack.c.l.b16 %v94
    %v547 = vunpack.c.h.b16 %v94
    %v548 = vunpack.c.l.b16 %v95
    %v549 = vunpack.c.h.b16 %v95
    %v550 = vunpack.c.l.b16 %v96
    %v551 = vunpack.c.h.b16 %v96
    %v552 = vunpack.c.l.b16 %v97
    %v553 = vunpack.c.h.b16 %v97
    %v554 = vunpack.c.l.b16 %v98
    %v555 = vunpack.c.h.b16 %v98
    %v556 = vunpack.c.l.b16 %v99
    %v557 = vunpack.c.h.b16 %v99
    %v558 = vunpack.c.l.b16 %v100
    %v559 = vunpack.c.h.b16 %v100
    %v560 = vunpack.c.l.b16 %v101
    %v561 = vunpack.c.h.b16 %v101
    %v562 = vunpack.c.l.b16 %v102
    %v563 = vunpack.c.h.b16 %v102
    %v564 = vunpack.c.l.b16 %v103
    %v565 = vunpack.c.h.b16 %v103
    %v566 = vunpack.c.l.b16 %v104
    %v567 = vunpack.c.h.b16 %v104
    %v568 = vunpack.c.l.b16 %v105
    %v569 = vunpack.c.h.b16 %v105
    %v570 = vunpack.c.l.b16 %v106
    %v571 = vunpack.c.h.b16 %v106
    %v572 = vunpack.c.l.b16 %v107
    %v573 = vunpack.c.h.b16 %v107
    %v574 = vunpack.c.l.b16 %v108
    %v575 = vunpack.c.h.b16 %v108
    %v576 = vunpack.c.l.b16 %v109
    %v577 = vunpack.c.h.b16 %v109
    %v578 = vunpack.c.l.b16 %v110
    %v579 = vunpack.c.h.b16 %v110
    %v580 = vunpack.c.l.b16 %v111
    %v581 = vunpack.c.h.b16 %v111
    %v582 = vunpack.c.l.b16 %v112
    %v583 = vunpack.c.h.b16 %v112
    %v584 = vunpack.c.l.b16 %v113
    %v585 = vunpack.c.h.b16 %v113
    %v586 = vunpack.c.l.b16 %v114
    %v587 = vunpack.c.h.b16 %v114
    %v588 = vunpack.c.l.b16 %v115
    %v589 = vunpack.c.h.b16 %v115
    %v590 = vunpack.c.l.b16 %v116
    %v591 = vunpack.c.h.b16 %v116
    %v592 = vunpack.c.l.b16 %v117
    %v593 = vunpack.c.h.b16 %v117
    %v594 = vunpack.c.l.b16 %v118
    %v595 = vunpack.c.h.b16 %v118
    %v596 = vunpack.c.l.b16 %v119
    %v597 = vunpack.c.h.b16 %v119
    %v598 = vunpack.c.l.b16 %v120
    %v599 = vunpack.c.h.b16 %v120
    %v600 = vunpack.c.l.b16 %v121
    %v601 = vunpack.c.h.b16 %v121
    %v602 = vunpack.c.l.b16 %v122
    %v603 = vunpack.c.h.b16 %v122
    %v604 = vunpack.c.l.b16 %v123
    %v605 = vunpack.c.h.b16 %v123
    %v606 = vunpack.c.l.b16 %v124
    %v607 = vunpack.c.h.b16 %v124
    %v608 = vunpack.c.l.b16 %v125
    %v609 = vunpack.c.h.b16 %v125
    %v610 = vunpack.c.l.b16 %v126
    %v611 = vunpack.c.h.b16 %v126
    %v612 = vunpack.c.l.b16 %v127
    %v613 = vunpack.c.h.b16 %v127
    %v614 = vunpack.c.l.b16 %v128
    %v615 = vunpack.c.h.b16 %v128
    %v616 = vunpack.c.l.b16 %v129
    %v617 = vunpack.c.h.b16 %v129
    %v618 = vunpack.c.l.b16 %v130
    %v619 = vunpack.c.h.b16 %v130
    %v620 = vunpack.c.l.b16 %v131
    %v621 = vunpack.c.h.b16 %v131
    %v622 = vunpack.c.l.b16 %v132
    %v623 = vunpack.c.h.b16 %v132
    %v624 = vunpack.c.l.b16 %v133
    %v625 = vunpack.c.h.b16 %v133
    %v626 = vunpack.c.l.b16 %v134
    %v627 = vunpack.c.h.b16 %v134
    %v628 = vunpack.c.l.b16 %v135
    %v629 = vunpack.c.h.b16 %v135
    %v630 = vunpack.c.l.b16 %v136
    %v631 = vunpack.c.h.b16 %v136
    %v632 = vunpack.c.l.b16 %v137
    %v633 = vunpack.c.h.b16 %v137
    %v634 = vunpack.c.l.b16 %v138
    %v635 = vunpack.c.h.b16 %v138
    %v636 = vunpack.c.l.b16 %v139
    %v637 = vunpack.c.h.b16 %v139
    %v638 = vunpack.c.l.b16 %v140
    %v639 = vunpack.c.h.b16 %v140
    %v640 = vunpack.c.l.b16 %v141
    %v641 = vunpack.c.h.b16 %v141
    %v642 = vunpack.c.l.b16 %v142
    %v643 = vunpack.c.h.b16 %v142
    %v644 = vunpack.c.l.b16 %v143
    %v645 = vunpack.c.h.b16 %v143
    %v646 = vunpack.c.l.b16 %v144
    %v647 = vunpack.c.h.b16 %v144
    %v648 = vunpack.c.l.b16 %v145
    %v649 = vunpack.c.h.b16 %v145
    %v650 = vunpack.c.l.b16 %v146
    %v651 = vunpack.c.h.b16 %v146
    %v652 = vunpack.c.l.b16 %v147
    %v653 = vunpack.c.h.b16 %v147
    %v654 = vunpack.c.l.b16 %v148
    %v655 = vunpack.c.h.b16 %v148
    %v656 = vunpack.c.l.b16 %v149
    %v657 = vunpack.c.h.b16 %v149
    %v658 = vunpack.c.l.b16 %v150
    %v659 = vunpack.c.h.b16 %v150
    %v660 = vunpack.c.l.b16 %v151
    %v661 = vunpack.c.h.b16 %v151
    %v662 = vunpack.c.l.b16 %v152
    %v663 = vunpack.c.h.b16 %v152
    %v664 = vunpack.c.l.b16 %v153
    %v665 = vunpack.c.h.b16 %v153
    %v666 = vunpack.c.l.b16 %v154
    %v667 = vunpack.c.h.b16 %v154
    %v668 = vunpack.c.l.b16 %v155
    %v669 = vunpack.c.h.b16 %v155
    %v670 = vunpack.c.l.b16 %v156
    %v671 = vunpack.c.h.b16 %v156
    %v672 = vunpack.c.l.b16 %v157
    %v673 = vunpack.c.h.b16 %v157
    %v674 = vunpack.c.l.b16 %v158
    %v675 = vunpack.c.h.b16 %v158
    %v676 = vunpack.c.l.b16 %v159
    %v677 = vunpack.c.h.b16 %v159
    %v678 = vunpack.c.l.b16 %v160
    %v679 = vunpack.c.h.b16 %v160
    %v680 = vunpack.c.l.b16 %v161
    %v681 = vunpack.c.h.b16 %v161
    %v682 = vunpack.c.l.b16 %v162
    %v683 = vunpack.c.h.b16 %v162
    %v684 = vunpack.c.l.b16 %v163
    %v685 = vunpack.c.h.b16 %v163
    %v686 = vunpack.c.l.b16 %v164
    %v687 = vunpack.c.h.b16 %v164
    %v688 = vunpack.c.l.b16 %v165
    %v689 = vunpack.c.h.b16 %v165
    %v690 = vunpack.c.l.b16 %v166
    %v691 = vunpack.c.h.b16 %v166
    %v692 = vunpack.c.l.b16 %v167
    %v693 = vunpack.c.h.b16 %v167
    %v694 = vunpack.c.l.b16 %v168
    %v695 = vunpack.c.h.b16 %v168
    %v696 = vunpack.c.l.b16 %v169
    %v697 = vunpack.c.h.b16 %v169
    %v698 = vunpack.c.l.b16 %v170
    %v699 = vunpack.c.h.b16 %v170
    %v700 = vunpack.c.l.b16 %v171
    %v701 = vunpack.c.h.b16 %v171
    %v702 = vunpack.c.l.b16 %v172
    %v703 = vunpack.c.h.b16 %v172
    %v704 = vunpack.c.l.b16 %v173
    %v705 = vunpack.c.h.b16 %v173
    %v706 = vunpack.c.l.b16 %v174
    %v707 = vunpack.c.h.b16 %v174
    %v708 = vunpack.c.l.b16 %v175
    %v709 = vunpack.c.h.b16 %v175
    %v710 = vunpack.c.l.b16 %v176
    %v711 = vunpack.c.h.b16 %v176
    %v712 = vunpack.c.l.b16 %v177
    %v713 = vunpack.c.h.b16 %v177
    %v714 = vunpack.c.l.b16 %v178
    %v715 = vunpack.c.h.b16 %v178
    %v716 = vunpack.c.l.b16 %v179
    %v717 = vunpack.c.h.b16 %v179
    %v718 = vunpack.c.l.b16 %v180
    %v719 = vunpack.c.h.b16 %v180
    %v720 = vunpack.c.l.b16 %v181
    %v721 = vunpack.c.h.b16 %v181
    %v722 = vunpack.c.l.b16 %v182
    %v723 = vunpack.c.h.b16 %v182
    %v724 = vunpack.c.l.b16 %v183
    %v725 = vunpack.c.h.b16 %v183
    %v726 = vunpack.c.l.b16 %v184
    %v727 = vunpack.c.h.b16 %v184
    %v728 = vunpack.c.l.b16 %v185
    %v729 = vunpack.c.h.b16 %v185
    %v730 = vunpack.c.l.b16 %v186
    %v731 = vunpack.c.h.b16 %v186
    %v732 = vunpack.c.l.b16 %v187
    %v733 = vunpack.c.h.b16 %v187
    %v734 = vunpack.c.l.b16 %v188
    %v735 = vunpack.c.h.b16 %v188
    %v736 = vunpack.c.l.b16 %v189
    %v737 = vunpack.c.h.b16 %v189
    %v738 = vunpack.c.l.b16 %v190
    %v739 = vunpack.c.h.b16 %v190
    %v740 = vunpack.c.l.b16 %v191
    %v741 = vunpack.c.h.b16 %v191
    %v742 = vunpack.c.l.b16 %v192
    %v743 = vunpack.c.h.b16 %v192
    %v744 = vunpack.c.l.b16 %v193
    %v745 = vunpack.c.h.b16 %v193
    %v746 = vunpack.c.l.b16 %v194
    %v747 = vunpack.c.h.b16 %v194
    %v748 = vunpack.c.l.b16 %v195
    %v749 = vunpack.c.h.b16 %v195
    %v750 = vunpack.c.l.b16 %v196
    %v751 = vunpack.c.h.b16 %v196
    %v752 = vunpack.c.l.b16 %v197
    %v753 = vunpack.c.h.b16 %v197
    %v754 = vunpack.c.l.b16 %v198
    %v755 = vunpack.c.h.b16 %v198
    %v756 = vunpack.c.l.b16 %v199
    %v757 = vunpack.c.h.b16 %v199
    %v758 = vunpack.c.l.b16 %v200
    %v759 = vunpack.c.h.b16 %v200
    %v760 = vunpack.c.l.b16 %v201
    %v761 = vunpack.c.h.b16 %v201
    %v762 = vunpack.c.l.b16 %v202
    %v763 = vunpack.c.h.b16 %v202
    %v764 = vunpack.c.l.b16 %v203
    %v765 = vunpack.c.h.b16 %v203
    %v766 = vunpack.c.l.b16 %v204
    %v767 = vunpack.c.h.b16 %v204
    %v768 = vunpack.c.l.b16 %v205
    %v769 = vunpack.c.h.b16 %v205
    %v770 = vunpack.c.l.b16 %v206
    %v771 = vunpack.c.h.b16 %v206
    %v772 = vunpack.c.l.b16 %v207
    %v773 = vunpack.c.h.b16 %v207
    %v774 = vunpack.c.l.b16 %v208
    %v775 = vunpack.c.h.b16 %v208
    %v776 = vunpack.c.l.b16 %v209
    %v777 = vunpack.c.h.b16 %v209
    %v778 = vunpack.c.l.b16 %v210
    %v779 = vunpack.c.h.b16 %v210
    %v780 = vunpack.c.l.b16 %v211
    %v781 = vunpack.c.h.b16 %v211
    %v782 = vunpack.c.l.b16 %v212
    %v783 = vunpack.c.h.b16 %v212
    %v784 = vunpack.c.l.b16 %v213
    %v785 = vunpack.c.h.b16 %v213
    %v786 = vunpack.c.l.b16 %v214
    %v787 = vunpack.c.h.b16 %v214
    %v788 = vunpack.c.l.b16 %v215
    %v789 = vunpack.c.h.b16 %v215
    %v790 = vunpack.c.l.b16 %v216
    %v791 = vunpack.c.h.b16 %v216
    %v792 = vunpack.c.l.b16 %v217
    %v793 = vunpack.c.h.b16 %v217
    %v794 = vunpack.c.l.b16 %v218
    %v795 = vunpack.c.h.b16 %v218
    %v796 = vunpack.c.l.b16 %v219
    %v797 = vunpack.c.h.b16 %v219
    %v798 = vunpack.c.l.b16 %v220
    %v799 = vunpack.c.h.b16 %v220
    %v800 = vunpack.c.l.b16 %v221
    %v801 = vunpack.c.h.b16 %v221
    %v802 = vunpack.c.l.b16 %v222
    %v803 = vunpack.c.h.b16 %v222
    %v804 = vunpack.c.l.b16 %v223
    %v805 = vunpack.c.h.b16 %v223
    %v806 = vunpack.c.l.b16 %v224
    %v807 = vunpack.c.h.b16 %v224
    %v808 = vunpack.c.l.b16 %v225
    %v809 = vunpack.c.h.b16 %v225
    %v810 = vunpack.c.l.b16 %v226
    %v811 = vunpack.c.h.b16 %v226
    %v812 = vunpack.c.l.b16 %v227
    %v813 = vunpack.c.h.b16 %v227
    %v814 = vunpack.c.l.b16 %v228
    %v815 = vunpack.c.h.b16 %v228
    %v816 = vunpack.c.l.b16 %v229
    %v817 = vunpack.c.h.b16 %v229
    %v818 = vunpack.c.l.b16 %v230
    %v819 = vunpack.c.h.b16 %v230
    %v820 = vunpack.c.l.b16 %v231
    %v821 = vunpack.c.h.b16 %v231
    %v822 = vunpack.c.l.b16 %v232
    %v823 = vunpack.c.h.b16 %v232
    %v824 = vunpack.c.l.b16 %v233
    %v825 = vunpack.c.h.b16 %v233
    %v826 = vunpack.c.l.b16 %v234
    %v827 = vunpack.c.h.b16 %v234
    %v828 = vunpack.c.l.b16 %v235
    %v829 = vunpack.c.h.b16 %v235
    %v830 = vunpack.c.l.b16 %v236
    %v831 = vunpack.c.h.b16 %v236
    %v832 = vunpack.c.l.b16 %v237
    %v833 = vunpack.c.h.b16 %v237
    %v834 = vunpack.c.l.b16 %v238
    %v835 = vunpack.c.h.b16 %v238
    %v836 = vunpack.c.l.b16 %v239
    %v837 = vunpack.c.h.b16 %v239
    %v838 = vunpack.c.l.b16 %v240
    %v839 = vunpack.c.h.b16 %v240
    %v840 = vunpack.c.l.b16 %v241
    %v841 = vunpack.c.h.b16 %v241
    %v842 = vunpack.c.l.b16 %v242
    %v843 = vunpack.c.h.b16 %v242
    %v844 = vunpack.c.l.b16 %v243
    %v845 = vunpack.c.h.b16 %v243
    %v846 = vunpack.c.l.b16 %v244
    %v847 = vunpack.c.h.b16 %v244
    %v848 = vunpack.c.l.b16 %v245
    %v849 = vunpack.c.h.b16 %v245
    %v850 = vunpack.c.l.b16 %v246
    %v851 = vunpack.c.h.b16 %v246
    %v852 = vunpack.c.l.b16 %v247
    %v853 = vunpack.c.h.b16 %v247
    %v854 = vunpack.c.l.b16 %v248
    %v855 = vunpack.c.h.b16 %v248
    %v856 = vunpack.c.l.b16 %v249
    %v857 = vunpack.c.h.b16 %v249
    %v858 = vunpack.c.l.b16 %v250
    %v859 = vunpack.c.h.b16 %v250
    %v860 = vunpack.c.l.b16 %v251
    %v861 = vunpack.c.h.b16 %v251
    %v862 = vpack.c.b16 %v474, %v470
    %v863 = vpack.c.b16 %v475, %v471
    %v864 = vpack.c.b16 %v476, %v472
    %v865 = vpack.c.b16 %v477, %v473
    %v866 = vpack.c.b16 %v482, %v478
    %v867 = vpack.c.b16 %v483, %v479
    %v868 = vpack.c.b16 %v484, %v480
    %v869 = vpack.c.b16 %v485, %v481
    %v870 = vpack.c.b16 %v490, %v486
    %v871 = vpack.c.b16 %v491, %v487
    %v872 = vpack.c.b16 %v492, %v488
    %v873 = vpack.c.b16 %v493, %v489
    %v874 = vpack.c.b16 %v498, %v494
    %v875 = vpack.c.b16 %v499, %v495
    %v876 = vpack.c.b16 %v500, %v496
    %v877 = vpack.c.b16 %v501, %v497
    %v878 = vpack.c.b16 %v506, %v502
    %v879 = vpack.c.b16 %v507, %v503
    %v880 = vpack.c.b16 %v508, %v504
    %v881 = vpack.c.b16 %v509, %v505
    %v882 = vpack.c.b16 %v514, %v510
    %v883 = vpack.c.b16 %v515, %v511
    %v884 = vpack.c.b16 %v516, %v512
    %v885 = vpack.c.b16 %v517, %v513
    %v886 = vpack.c.b16 %v522, %v518
    %v887 = vpack.c.b16 %v523, %v519
    %v888 = vpack.c.b16 %v524, %v520
    %v889 = vpack.c.b16 %v525, %v521
    %v890 = vpack.c.b16 %v530, %v526
    %v891 = vpack.c.b16 %v531, %v527
    %v892 = vpack.c.b16 %v532, %v528
    %v893 = vpack.c.b16 %v533, %v529
    %v894 = vpack.c.b16 %v538, %v534
    %v895 = vpack.c.b16 %v539, %v535
    %v896 = vpack.c.b16 %v540, %v536
    %v897 = vpack.c.b16 %v541, %v537
    %v898 = vpack.c.b16 %v546, %v542
    %v899 = vpack.c.b16 %v547, %v543
    %v900 = vpack.c.b16 %v548, %v544
    %v901 = vpack.c.b16 %v549, %v545
    %v902 = vpack.c.b16 %v554, %v550
    %v903 = vpack.c.b16 %v555, %v551
    %v904 = vpack.c.b16 %v556, %v552
    %v905 = vpack.c.b16 %v557, %v553
    %v906 = vpack.c.b16 %v562, %v558
    %v907 = vpack.c.b16 %v563, %v559
    %v908 = vpack.c.b16 %v564, %v560
    %v909 = vpack.c.b16 %v565, %v561
    %v910 = vpack.c.b16 %v570, %v566
    %v911 = vpack.c.b16 %v571, %v567
    %v912 = vpack.c.b16 %v572, %v568
    %v913 = vpack.c.b16 %v573, %v569
    %v914 = vpack.c.b16 %v578, %v574
    %v915 = vpack.c.b16 %v579, %v575
    %v916 = vpack.c.b16 %v580, %v576
    %v917 = vpack.c.b16 %v581, %v577
    %v918 = vpack.c.b16 %v586, %v582
    %v919 = vpack.c.b16 %v587, %v583
    %v920 = vpack.c.b16 %v588, %v584
    %v921 = vpack.c.b16 %v589, %v585
    %v922 = vpack.c.b16 %v594, %v590
    %v923 = vpack.c.b16 %v595, %v591
    %v924 = vpack.c.b16 %v596, %v592
    %v925 = vpack.c.b16 %v597, %v593
    %v926 = vpack.c.b16 %v602, %v598
    %v927 = vpack.c.b16 %v603, %v599
    %v928 = vpack.c.b16 %v604, %v600
    %v929 = vpack.c.b16 %v605, %v601
    %v930 = vpack.c.b16 %v610, %v606
    %v931 = vpack.c.b16 %v611, %v607
    %v932 = vpack.c.b16 %v612, %v608
    %v933 = vpack.c.b16 %v613, %v609
    %v934 = vpack.c.b16 %v618, %v614
    %v935 = vpack.c.b16 %v619, %v615
    %v936 = vpack.c.b16 %v620, %v616
    %v937 = vpack.c.b16 %v621, %v617
    %v938 = vpack.c.b16 %v626, %v622
    %v939 = vpack.c.b16 %v627, %v623
    %v940 = vpack.c.b16 %v628, %v624
    %v941 = vpack.c.b16 %v629, %v625
    %v942 = vpack.c.b16 %v634, %v630
    %v943 = vpack.c.b16 %v635, %v631
    %v944 = vpack.c.b16 %v636, %v632
    %v945 = vpack.c.b16 %v637, %v633
    %v946 = vpack.c.b16 %v642, %v638
    %v947 = vpack.c.b16 %v643, %v639
    %v948 = vpack.c.b16 %v644, %v640
    %v949 = vpack.c.b16 %v645, %v641
    %v950 = vpack.c.b16 %v650, %v646
    %v951 = vpack.c.b16 %v651, %v647
    %v952 = vpack.c.b16 %v652, %v648
    %v953 = vpack.c.b16 %v653, %v649
    %v954 = vpack.c.b16 %v658, %v654
    %v955 = vpack.c.b16 %v659, %v655
    %v956 = vpack.c.b16 %v660, %v656
    %v957 = vpack.c.b16 %v661, %v657
    %v958 = vpack.c.b16 %v666, %v662
    %v959 = vpack.c.b16 %v667, %v663
    %v960 = vpack.c.b16 %v668, %v664
    %v961 = vpack.c.b16 %v669, %v665
    %v962 = vpack.c.b16 %v674, %v670
    %v963 = vpack.c.b16 %v675, %v671
    %v964 = vpack.c.b16 %v676, %v672
    %v965 = vpack.c.b16 %v677, %v673
    %v966 = vpack.c.b16 %v682, %v678
    %v967 = vpack.c.b16 %v683, %v679
    %v968 = vpack.c.b16 %v684, %v680
    %v969 = vpack.c.b16 %v685, %v681
    %v970 = vpack.c.b16 %v690, %v686
    %v971 = vpack.c.b16 %v691, %v687
    %v972 = vpack.c.b16 %v692, %v688
    %v973 = vpack.c.b16 %v693, %v689
    %v974 = vpack.c.b16 %v698, %v694
    %v975 = vpack.c.b16 %v699, %v695
    %v976 = vpack.c.b16 %v700, %v696
    %v977 = vpack.c.b16 %v701, %v697
    %v978 = vpack.c.b16 %v706, %v702
    %v979 = vpack.c.b16 %v707, %v703
    %v980 = vpack.c.b16 %v708, %v704
    %v981 = vpack.c.b16 %v709, %v705
    %v982 = vpack.c.b16 %v714, %v710
    %v983 = vpack.c.b16 %v715, %v711
    %v984 = vpack.c.b16 %v716, %v712
    %v985 = vpack.c.b16 %v717, %v713
    %v986 = vpack.c.b16 %v722, %v718
    %v987 = vpack.c.b16 %v723, %v719
    %v988 = vpack.c.b16 %v724, %v720
    %v989 = vpack.c.b16 %v725, %v721
    %v990 = vpack.c.b16 %v730, %v726
    %v991 = vpack.c.b16 %v731, %v727
    %v992 = vpack.c.b16 %v732, %v728
    %v993 = vpack.c.b16 %v733, %v729
    %v994 = vpack.c.b16 %v738, %v734
    %v995 = vpack.c.b16 %v739, %v735
    %v996 = vpack.c.b16 %v740, %v736
    %v997 = vpack.c.b16 %v741, %v737
    %v998 = vpack.c.b16 %v746, %v742
    %v999 = vpack.c.b16 %v747, %v743
    %v1000 = vpack.c.b16 %v748, %v744
    %v1001 = vpack.c.b16 %v749, %v745
    %v1002 = vpack.c.b16 %v754, %v750
    %v1003 = vpack.c.b16 %v755, %v751
    %v1004 = vpack.c.b16 %v756, %v752
    %v1005 = vpack.c.b16 %v757, %v753
    %v1006 = vpack.c.b16 %v762, %v758
    %v1007 = vpack.c.b16 %v763, %v759
    %v1008 = vpack.c.b16 %v764, %v760
    %v1009 = vpack.c.b16 %v765, %v761
    %v1010 = vpack.c.b16 %v770, %v766
    %v1011 = vpack.c.b16 %v771, %v767
    %v1012 = vpack.c.b16 %v772, %v768
    %v1013 = vpack.c.b16 %v773, %v769
    %v1014 = vpack.c.b16 %v778, %v774
    %v1015 = vpack.c.b16 %v779, %v775
    %v1016 = vpack.c.b16 %v780, %v776
    %v1017 = vpack.c.b16 %v781, %v777
    %v1018 = vpack.c.b16 %v786, %v782
    %v1019 = vpack.c.b16 %v787, %v783
    %v1020 = vpack.c.b16 %v788, %v784
    %v1021 = vpack.c.b16 %v789, %v785
    %v1022 = vpack.c.b16 %v794, %v790
    %v1023 = vpack.c.b16 %v795, %v791
    %v1024 = vpack.c.b16 %v796, %v792
    %v1025 = vpack.c.b16 %v797, %v793
    %v1026 = vpack.c.b16 %v802, %v798
    %v1027 = vpack.c.b16 %v803, %v799
    %v1028 = vpack.c.b16 %v804, %v800
    %v1029 = vpack.c.b16 %v805, %v801
    %v1030 = vpack.c.b16 %v810, %v806
    %v1031 = vpack.c.b16 %v811, %v807
    %v1032 = vpack.c.b16 %v812, %v808
    %v1033 = vpack.c.b16 %v813, %v809
    %v1034 = vpack.c.b16 %v818, %v814
    %v1035 = vpack.c.b16 %v819, %v815
    %v1036 = vpack.c.b16 %v820, %v816
    %v1037 = vpack.c.b16 %v821, %v817
    %v1038 = vpack.c.b16 %v826, %v822
    %v1039 = vpack.c.b16 %v827, %v823
    %v1040 = vpack.c.b16 %v828, %v824
    %v1041 = vpack.c.b16 %v829, %v825
    %v1042 = vpack.c.b16 %v834, %v830
    %v1043 = vpack.c.b16 %v835, %v831
    %v1044 = vpack.c.b16 %v836, %v832
    %v1045 = vpack.c.b16 %v837, %v833
    %v1046 = vpack.c.b16 %v842, %v838
    %v1047 = vpack.c.b16 %v843, %v839
    %v1048 = vpack.c.b16 %v844, %v840
    %v1049 = vpack.c.b16 %v845, %v841
    %v1050 = vpack.c.b16 %v850, %v846
    %v1051 = vpack.c.b16 %v851, %v847
    %v1052 = vpack.c.b16 %v852, %v848
    %v1053 = vpack.c.b16 %v853, %v849
    %v1054 = vpack.c.b16 %v858, %v854
    %v1055 = vpack.c.b16 %v859, %v855
    %v1056 = vpack.c.b16 %v860, %v856
    %v1057 = vpack.c.b16 %v861, %v857
    %vm1254 = vcmask 130048
    %v1256 = vsel %vm1254, %v55, 0
    %1258 = vmatprep.subr.bf16.mxu0 %v891
    %1259 = vmatpush1.bf16.msra.mxu0 %v890
    %1260 = vmatprep.subr.bf16.mxu0 %v887
    %1261 = vmatpush1.bf16.msra.mxu0 %v886
    %1262 = vmatprep.subr.bf16.mxu0 %v883
    %1263 = vmatpush1.bf16.msra.mxu0 %v882
    %1264 = vmatprep.subr.bf16.mxu0 %v879
    %1265 = vmatpush1.bf16.msra.mxu0 %v878
    %1266 = vmatprep.subr.bf16.mxu0 %v875
    %1267 = vmatpush1.bf16.msra.mxu0 %v874
    %1268 = vmatprep.subr.bf16.mxu0 %v871
    %1269 = vmatpush1.bf16.msra.mxu0 %v870
    %1270 = vmatprep.subr.bf16.mxu0 %v867
    %1271 = vmatpush1.bf16.msra.mxu0 %v866
    %1272 = vmatprep.subr.bf16.mxu0 %v863
    %1273 = vmatpush1.bf16.msra.mxu0 %v862
    %1274 = vmatprep.subr.bf16.mxu0 %v923
    %1275 = vmatpush2.bf16.msra.mxu0 %v922
    %1276 = vmatprep.subr.bf16.mxu0 %v919
    %1277 = vmatpush2.bf16.msra.mxu0 %v918
    %1278 = vmatprep.subr.bf16.mxu0 %v915
    %1279 = vmatpush2.bf16.msra.mxu0 %v914
    %1280 = vmatprep.subr.bf16.mxu0 %v911
    %1281 = vmatpush2.bf16.msra.mxu0 %v910
    %1282 = vmatprep.subr.bf16.mxu0 %v907
    %1283 = vmatpush2.bf16.msra.mxu0 %v906
    %1284 = vmatprep.subr.bf16.mxu0 %v903
    %1285 = vmatpush2.bf16.msra.mxu0 %v902
    %1286 = vmatprep.subr.bf16.mxu0 %v899
    %1287 = vmatpush2.bf16.msra.mxu0 %v898
    %1288 = vmatprep.subr.bf16.mxu0 %v895
    %1289 = vmatpush2.bf16.msra.mxu0 %v894
    %1290 = vmatprep.mubr.bf16.mxu0 %v50
    %1291 = vmatmul.mubr.bf16.gmra.mxu0 %v49
    %v1292 = vpop.f32.mrf.mxu0
    %v1293 = vadd.f32 %v257, %v1292
    %v1294 = vpop.f32.mrf.mxu0
    %v1295 = vadd.f32 %v261, %v1294
    %v1296 = vpop.f32.mrf.mxu0
    %v1297 = vadd.f32 %v257, %v1296
    %v1298 = vpop.f32.mrf.mxu0
    %v1299 = vadd.f32 %v261, %v1298
    %1300 = vdwg.mxu0
    %1301 = vmatprep.subr.bf16.mxu0 %v955
    %1302 = vmatpush1.bf16.msra.mxu0 %v954
    %1303 = vmatprep.subr.bf16.mxu0 %v951
    %1304 = vmatpush1.bf16.msra.mxu0 %v950
    %1305 = vmatprep.subr.bf16.mxu0 %v947
    %1306 = vmatpush1.bf16.msra.mxu0 %v946
    %1307 = vmatprep.subr.bf16.mxu0 %v943
    %1308 = vmatpush1.bf16.msra.mxu0 %v942
    %1309 = vmatprep.subr.bf16.mxu0 %v939
    %1310 = vmatpush1.bf16.msra.mxu0 %v938
    %1311 = vmatprep.subr.bf16.mxu0 %v935
    %1312 = vmatpush1.bf16.msra.mxu0 %v934
    %1313 = vmatprep.subr.bf16.mxu0 %v931
    %1314 = vmatpush1.bf16.msra.mxu0 %v930
    %1315 = vmatprep.subr.bf16.mxu0 %v927
    %1316 = vmatpush1.bf16.msra.mxu0 %v926
    %1317 = vmatprep.subr.bf16.mxu0 %v987
    %1318 = vmatpush2.bf16.msra.mxu0 %v986
    %1319 = vmatprep.subr.bf16.mxu0 %v983
    %1320 = vmatpush2.bf16.msra.mxu0 %v982
    %1321 = vmatprep.subr.bf16.mxu0 %v979
    %1322 = vmatpush2.bf16.msra.mxu0 %v978
    %1323 = vmatprep.subr.bf16.mxu0 %v975
    %1324 = vmatpush2.bf16.msra.mxu0 %v974
    %1325 = vmatprep.subr.bf16.mxu0 %v971
    %1326 = vmatpush2.bf16.msra.mxu0 %v970
    %1327 = vmatprep.subr.bf16.mxu0 %v967
    %1328 = vmatpush2.bf16.msra.mxu0 %v966
    %1329 = vmatprep.subr.bf16.mxu0 %v963
    %1330 = vmatpush2.bf16.msra.mxu0 %v962
    %1331 = vmatprep.subr.bf16.mxu0 %v959
    %1332 = vmatpush2.bf16.msra.mxu0 %v958
    %1333 = vmatprep.mubr.bf16.mxu0 %v52
    %1334 = vmatmul.mubr.bf16.gmra.mxu0 %v51
    %v1335 = vpop.f32.mrf.mxu0
    %v1336 = vadd.f32 %v1293, %v1335
    %v1337 = vpop.f32.mrf.mxu0
    %v1338 = vadd.f32 %v1295, %v1337
    %v1339 = vpop.f32.mrf.mxu0
    %v1340 = vadd.f32 %v1297, %v1339
    %v1341 = vpop.f32.mrf.mxu0
    %v1342 = vadd.f32 %v1299, %v1341
    %1343 = vdwg.mxu0
    %1344 = vmatprep.subr.bf16.mxu0 %v1019
    %1345 = vmatpush1.bf16.msra.mxu0 %v1018
    %1346 = vmatprep.subr.bf16.mxu0 %v1015
    %1347 = vmatpush1.bf16.msra.mxu0 %v1014
    %1348 = vmatprep.subr.bf16.mxu0 %v1011
    %1349 = vmatpush1.bf16.msra.mxu0 %v1010
    %1350 = vmatprep.subr.bf16.mxu0 %v1007
    %1351 = vmatpush1.bf16.msra.mxu0 %v1006
    %1352 = vmatprep.subr.bf16.mxu0 %v1003
    %1353 = vmatpush1.bf16.msra.mxu0 %v1002
    %1354 = vmatprep.subr.bf16.mxu0 %v999
    %1355 = vmatpush1.bf16.msra.mxu0 %v998
    %1356 = vmatprep.subr.bf16.mxu0 %v995
    %1357 = vmatpush1.bf16.msra.mxu0 %v994
    %1358 = vmatprep.subr.bf16.mxu0 %v991
    %1359 = vmatpush1.bf16.msra.mxu0 %v990
    %1360 = vmatprep.subr.bf16.mxu0 %v1051
    %1361 = vmatpush2.bf16.msra.mxu0 %v1050
    %1362 = vmatprep.subr.bf16.mxu0 %v1047
    %1363 = vmatpush2.bf16.msra.mxu0 %v1046
    %1364 = vmatprep.subr.bf16.mxu0 %v1043
    %1365 = vmatpush2.bf16.msra.mxu0 %v1042
    %1366 = vmatprep.subr.bf16.mxu0 %v1039
    %1367 = vmatpush2.bf16.msra.mxu0 %v1038
    %1368 = vmatprep.subr.bf16.mxu0 %v1035
    %1369 = vmatpush2.bf16.msra.mxu0 %v1034
    %1370 = vmatprep.subr.bf16.mxu0 %v1031
    %1371 = vmatpush2.bf16.msra.mxu0 %v1030
    %1372 = vmatprep.subr.bf16.mxu0 %v1027
    %1373 = vmatpush2.bf16.msra.mxu0 %v1026
    %1374 = vmatprep.subr.bf16.mxu0 %v1023
    %1375 = vmatpush2.bf16.msra.mxu0 %v1022
    %1376 = vmatprep.mubr.bf16.mxu0 %v54
    %1377 = vmatmul.mubr.bf16.gmra.mxu0 %v53
    %v1378 = vpop.f32.mrf.mxu0
    %v1379 = vadd.f32 %v1336, %v1378
    %v1380 = vpop.f32.mrf.mxu0
    %v1381 = vadd.f32 %v1338, %v1380
    %v1382 = vpop.f32.mrf.mxu0
    %v1383 = vadd.f32 %v1340, %v1382
    %v1384 = vpop.f32.mrf.mxu0
    %v1385 = vadd.f32 %v1342, %v1384
    %1386 = vdwg.mxu0
    %1387 = vmatprep.subr.bf16.mxu0 0
    %1388 = vmatpush1.bf16.msra.mxu0 0
    %1389 = vmatprep.subr.bf16.mxu0 0
    %1390 = vmatpush1.bf16.msra.mxu0 0
    %1391 = vmatprep.subr.bf16.mxu0 0
    %1392 = vmatpush1.bf16.msra.mxu0 0
    %1393 = vmatprep.subr.bf16.mxu0 0
    %1394 = vmatpush1.bf16.msra.mxu0 0
    %1395 = vmatprep.subr.bf16.mxu0 0
    %1396 = vmatpush1.bf16.msra.mxu0 0
    %1397 = vmatprep.subr.bf16.mxu0 0
    %1398 = vmatpush1.bf16.msra.mxu0 0
    %1399 = vmatprep.subr.bf16.mxu0 0
    %1400 = vmatpush1.bf16.msra.mxu0 0
    %1401 = vmatprep.subr.bf16.mxu0 %v1055
    %1402 = vmatpush1.bf16.msra.mxu0 %v1054
    %1403 = vmatprep.subr.bf16.mxu0 0
    %1404 = vmatpush2.bf16.msra.mxu0 0
    %1405 = vmatprep.subr.bf16.mxu0 0
    %1406 = vmatpush2.bf16.msra.mxu0 0
    %1407 = vmatprep.subr.bf16.mxu0 0
    %1408 = vmatpush2.bf16.msra.mxu0 0
    %1409 = vmatprep.subr.bf16.mxu0 0
    %1410 = vmatpush2.bf16.msra.mxu0 0
    %1411 = vmatprep.subr.bf16.mxu0 0
    %1412 = vmatpush2.bf16.msra.mxu0 0
    %1413 = vmatprep.subr.bf16.mxu0 0
    %1414 = vmatpush2.bf16.msra.mxu0 0
    %1415 = vmatprep.subr.bf16.mxu0 0
    %1416 = vmatpush2.bf16.msra.mxu0 0
    %1417 = vmatprep.subr.bf16.mxu0 0
    %1418 = vmatpush2.bf16.msra.mxu0 0
    %1419 = vmatprep.mubr.bf16.mxu0 0
    %1420 = vmatmul.mubr.bf16.gmra.mxu0 %v1256
    %v1421 = vpop.f32.mrf.mxu0
    %v1422 = vadd.f32 %v1379, %v1421
    %v1423 = vpop.f32.mrf.mxu0
    %v1424 = vadd.f32 %v1381, %v1423
    %v1425 = vpop.f32.mrf.mxu0
    %v1426 = vadd.f32 %v1383, %v1425
    %v1427 = vpop.f32.mrf.mxu0
    %v1428 = vadd.f32 %v1385, %v1427
    %1429 = vdwg.mxu0
    %1430 = vmatprep.subr.bf16.mxu0 %v893
    %1431 = vmatpush1.bf16.msra.mxu0 %v892
    %1432 = vmatprep.subr.bf16.mxu0 %v889
    %1433 = vmatpush1.bf16.msra.mxu0 %v888
    %1434 = vmatprep.subr.bf16.mxu0 %v885
    %1435 = vmatpush1.bf16.msra.mxu0 %v884
    %1436 = vmatprep.subr.bf16.mxu0 %v881
    %1437 = vmatpush1.bf16.msra.mxu0 %v880
    %1438 = vmatprep.subr.bf16.mxu0 %v877
    %1439 = vmatpush1.bf16.msra.mxu0 %v876
    %1440 = vmatprep.subr.bf16.mxu0 %v873
    %1441 = vmatpush1.bf16.msra.mxu0 %v872
    %1442 = vmatprep.subr.bf16.mxu0 %v869
    %1443 = vmatpush1.bf16.msra.mxu0 %v868
    %1444 = vmatprep.subr.bf16.mxu0 %v865
    %1445 = vmatpush1.bf16.msra.mxu0 %v864
    %1446 = vmatprep.subr.bf16.mxu0 %v925
    %1447 = vmatpush2.bf16.msra.mxu0 %v924
    %1448 = vmatprep.subr.bf16.mxu0 %v921
    %1449 = vmatpush2.bf16.msra.mxu0 %v920
    %1450 = vmatprep.subr.bf16.mxu0 %v917
    %1451 = vmatpush2.bf16.msra.mxu0 %v916
    %1452 = vmatprep.subr.bf16.mxu0 %v913
    %1453 = vmatpush2.bf16.msra.mxu0 %v912
    %1454 = vmatprep.subr.bf16.mxu0 %v909
    %1455 = vmatpush2.bf16.msra.mxu0 %v908
    %1456 = vmatprep.subr.bf16.mxu0 %v905
    %1457 = vmatpush2.bf16.msra.mxu0 %v904
    %1458 = vmatprep.subr.bf16.mxu0 %v901
    %1459 = vmatpush2.bf16.msra.mxu0 %v900
    %1460 = vmatprep.subr.bf16.mxu0 %v897
    %1461 = vmatpush2.bf16.msra.mxu0 %v896
    %1462 = vmatprep.mubr.bf16.mxu0 %v50
    %1463 = vmatmul.mubr.bf16.gmra.mxu0 %v49
    %v1464 = vpop.f32.mrf.mxu0
    %v1465 = vadd.f32 %v265, %v1464
    %v1466 = vpop.f32.mrf.mxu0
    %v1467 = vadd.f32 %v269, %v1466
    %v1468 = vpop.f32.mrf.mxu0
    %v1469 = vadd.f32 %v265, %v1468
    %v1470 = vpop.f32.mrf.mxu0
    %v1471 = vadd.f32 %v269, %v1470
    %1472 = vdwg.mxu0
    %1473 = vmatprep.subr.bf16.mxu0 %v957
    %1474 = vmatpush1.bf16.msra.mxu0 %v956
    %1475 = vmatprep.subr.bf16.mxu0 %v953
    %1476 = vmatpush1.bf16.msra.mxu0 %v952
    %1477 = vmatprep.subr.bf16.mxu0 %v949
    %1478 = vmatpush1.bf16.msra.mxu0 %v948
    %1479 = vmatprep.subr.bf16.mxu0 %v945
    %1480 = vmatpush1.bf16.msra.mxu0 %v944
    %1481 = vmatprep.subr.bf16.mxu0 %v941
    %1482 = vmatpush1.bf16.msra.mxu0 %v940
    %1483 = vmatprep.subr.bf16.mxu0 %v937
    %1484 = vmatpush1.bf16.msra.mxu0 %v936
    %1485 = vmatprep.subr.bf16.mxu0 %v933
    %1486 = vmatpush1.bf16.msra.mxu0 %v932
    %1487 = vmatprep.subr.bf16.mxu0 %v929
    %1488 = vmatpush1.bf16.msra.mxu0 %v928
    %1489 = vmatprep.subr.bf16.mxu0 %v989
    %1490 = vmatpush2.bf16.msra.mxu0 %v988
    %1491 = vmatprep.subr.bf16.mxu0 %v985
    %1492 = vmatpush2.bf16.msra.mxu0 %v984
    %1493 = vmatprep.subr.bf16.mxu0 %v981
    %1494 = vmatpush2.bf16.msra.mxu0 %v980
    %1495 = vmatprep.subr.bf16.mxu0 %v977
    %1496 = vmatpush2.bf16.msra.mxu0 %v976
    %1497 = vmatprep.subr.bf16.mxu0 %v973
    %1498 = vmatpush2.bf16.msra.mxu0 %v972
    %1499 = vmatprep.subr.bf16.mxu0 %v969
    %1500 = vmatpush2.bf16.msra.mxu0 %v968
    %1501 = vmatprep.subr.bf16.mxu0 %v965
    %1502 = vmatpush2.bf16.msra.mxu0 %v964
    %1503 = vmatprep.subr.bf16.mxu0 %v961
    %1504 = vmatpush2.bf16.msra.mxu0 %v960
    %1505 = vmatprep.mubr.bf16.mxu0 %v52
    %1506 = vmatmul.mubr.bf16.gmra.mxu0 %v51
    %v1507 = vpop.f32.mrf.mxu0
    %v1508 = vadd.f32 %v1465, %v1507
    %v1509 = vpop.f32.mrf.mxu0
    %v1510 = vadd.f32 %v1467, %v1509
    %v1511 = vpop.f32.mrf.mxu0
    %v1512 = vadd.f32 %v1469, %v1511
    %v1513 = vpop.f32.mrf.mxu0
    %v1514 = vadd.f32 %v1471, %v1513
    %1515 = vdwg.mxu0
    %1516 = vmatprep.subr.bf16.mxu0 %v1021
    %1517 = vmatpush1.bf16.msra.mxu0 %v1020
    %1518 = vmatprep.subr.bf16.mxu0 %v1017
    %1519 = vmatpush1.bf16.msra.mxu0 %v1016
    %1520 = vmatprep.subr.bf16.mxu0 %v1013
    %1521 = vmatpush1.bf16.msra.mxu0 %v1012
    %1522 = vmatprep.subr.bf16.mxu0 %v1009
    %1523 = vmatpush1.bf16.msra.mxu0 %v1008
    %1524 = vmatprep.subr.bf16.mxu0 %v1005
    %1525 = vmatpush1.bf16.msra.mxu0 %v1004
    %1526 = vmatprep.subr.bf16.mxu0 %v1001
    %1527 = vmatpush1.bf16.msra.mxu0 %v1000
    %1528 = vmatprep.subr.bf16.mxu0 %v997
    %1529 = vmatpush1.bf16.msra.mxu0 %v996
    %1530 = vmatprep.subr.bf16.mxu0 %v993
    %1531 = vmatpush1.bf16.msra.mxu0 %v992
    %1532 = vmatprep.subr.bf16.mxu0 %v1053
    %1533 = vmatpush2.bf16.msra.mxu0 %v1052
    %1534 = vmatprep.subr.bf16.mxu0 %v1049
    %1535 = vmatpush2.bf16.msra.mxu0 %v1048
    %1536 = vmatprep.subr.bf16.mxu0 %v1045
    %1537 = vmatpush2.bf16.msra.mxu0 %v1044
    %1538 = vmatprep.subr.bf16.mxu0 %v1041
    %1539 = vmatpush2.bf16.msra.mxu0 %v1040
    %1540 = vmatprep.subr.bf16.mxu0 %v1037
    %1541 = vmatpush2.bf16.msra.mxu0 %v1036
    %1542 = vmatprep.subr.bf16.mxu0 %v1033
    %1543 = vmatpush2.bf16.msra.mxu0 %v1032
    %1544 = vmatprep.subr.bf16.mxu0 %v1029
    %1545 = vmatpush2.bf16.msra.mxu0 %v1028
    %1546 = vmatprep.subr.bf16.mxu0 %v1025
    %1547 = vmatpush2.bf16.msra.mxu0 %v1024
    %1548 = vmatprep.mubr.bf16.mxu0 %v54
    %1549 = vmatmul.mubr.bf16.gmra.mxu0 %v53
    %v1550 = vpop.f32.mrf.mxu0
    %v1551 = vadd.f32 %v1508, %v1550
    %v1552 = vpop.f32.mrf.mxu0
    %v1553 = vadd.f32 %v1510, %v1552
    %v1554 = vpop.f32.mrf.mxu0
    %v1555 = vadd.f32 %v1512, %v1554
    %v1556 = vpop.f32.mrf.mxu0
    %v1557 = vadd.f32 %v1514, %v1556
    %1558 = vdwg.mxu0
    %1559 = vmatprep.subr.bf16.mxu0 0
    %1560 = vmatpush1.bf16.msra.mxu0 0
    %1561 = vmatprep.subr.bf16.mxu0 0
    %1562 = vmatpush1.bf16.msra.mxu0 0
    %1563 = vmatprep.subr.bf16.mxu0 0
    %1564 = vmatpush1.bf16.msra.mxu0 0
    %1565 = vmatprep.subr.bf16.mxu0 0
    %1566 = vmatpush1.bf16.msra.mxu0 0
    %1567 = vmatprep.subr.bf16.mxu0 0
    %1568 = vmatpush1.bf16.msra.mxu0 0
    %1569 = vmatprep.subr.bf16.mxu0 0
    %1570 = vmatpush1.bf16.msra.mxu0 0
    %1571 = vmatprep.subr.bf16.mxu0 0
    %1572 = vmatpush1.bf16.msra.mxu0 0
    %1573 = vmatprep.subr.bf16.mxu0 %v1057
    %1574 = vmatpush1.bf16.msra.mxu0 %v1056
    %1575 = vmatprep.subr.bf16.mxu0 0
    %1576 = vmatpush2.bf16.msra.mxu0 0
    %1577 = vmatprep.subr.bf16.mxu0 0
    %1578 = vmatpush2.bf16.msra.mxu0 0
    %1579 = vmatprep.subr.bf16.mxu0 0
    %1580 = vmatpush2.bf16.msra.mxu0 0
    %1581 = vmatprep.subr.bf16.mxu0 0
    %1582 = vmatpush2.bf16.msra.mxu0 0
    %1583 = vmatprep.subr.bf16.mxu0 0
    %1584 = vmatpush2.bf16.msra.mxu0 0
    %1585 = vmatprep.subr.bf16.mxu0 0
    %1586 = vmatpush2.bf16.msra.mxu0 0
    %1587 = vmatprep.subr.bf16.mxu0 0
    %1588 = vmatpush2.bf16.msra.mxu0 0
    %1589 = vmatprep.subr.bf16.mxu0 0
    %1590 = vmatpush2.bf16.msra.mxu0 0
    %1591 = vmatprep.mubr.bf16.mxu0 0
    %1592 = vmatmul.mubr.bf16.gmra.mxu0 %v1256
    %v1593 = vpop.f32.mrf.mxu0
    %v1594 = vadd.f32 %v1551, %v1593
    %v1595 = vpop.f32.mrf.mxu0
    %v1596 = vadd.f32 %v1553, %v1595
    %v1597 = vpop.f32.mrf.mxu0
    %v1598 = vadd.f32 %v1555, %v1597
    %v1599 = vpop.f32.mrf.mxu0
    %v1600 = vadd.f32 %v1557, %v1599
    %1601 = vdwg.mxu0
    %v1602 = vmax.f32 %v1422, 0.0
    %v1603 = vmax.f32 %v1424, 0.0
    %v1604 = vmax.f32 %v1594, 0.0
    %v1605 = vmax.f32 %v1596, 0.0
    %v1606 = vmax.f32 %v1426, 0.0
    %v1607 = vmax.f32 %v1428, 0.0
    %v1608 = vmax.f32 %v1598, 0.0
    %v1609 = vmax.f32 %v1600, 0.0
    %v1610 = vpack.c.bf16 %v1606, %v1602
    %v1611 = vpack.c.bf16 %v1607, %v1603
    %v1612 = vpack.c.bf16 %v1608, %v1604
    %v1613 = vpack.c.bf16 %v1609, %v1605
    %v1614 = vld [vmem:[%s3] sm:$0xf]
    %v1615 = vld [vmem:[%s3 + $0x4] sm:$0xf]
    %v1616 = vld [vmem:[%s3 + $0x8] sm:$0xf]
    %v1617 = vld [vmem:[%s3 + $0xc] sm:$0xf]
    %v1618 = vld [vmem:[%s3 + $0x10] sm:$0xf]
    %v1619 = vld [vmem:[%s3 + $0x14] sm:$0xf]
    %v1620 = vld [vmem:[%s3 + $0x18] sm:$0xf]
    %v1621 = vld [vmem:[%s3 + $0x1c] sm:$0xf]
    %v1622 = vld [vmem:[%s3 + $0x20] sm:$0xf]
    %v1623 = vld [vmem:[%s3 + $0x24] sm:$0xf]
    %v1624 = vld [vmem:[%s3 + $0x28] sm:$0xf]
    %v1625 = vld [vmem:[%s3 + $0x2c] sm:$0xf]
    %v1626 = vld [vmem:[%s3 + $0x30] sm:$0xf]
    %v1627 = vld [vmem:[%s3 + $0x34] sm:$0xf]
    %v1628 = vld [vmem:[%s3 + $0x38] sm:$0xf]
    %v1629 = vld [vmem:[%s3 + $0x3c] sm:$0xf]
    %v1630 = vld [vmem:[%s3 + $0x40] sm:$0xf]
    %v1631 = vld [vmem:[%s3 + $0x44] sm:$0xf]
    %v1632 = vld [vmem:[%s3 + $0x48] sm:$0xf]
    %v1633 = vld [vmem:[%s3 + $0x4c] sm:$0xf]
    %v1634 = vld [vmem:[%s3 + $0x50] sm:$0xf]
    %v1635 = vld [vmem:[%s3 + $0x54] sm:$0xf]
    %v1636 = vld [vmem:[%s3 + $0x58] sm:$0xf]
    %v1637 = vld [vmem:[%s3 + $0x5c] sm:$0xf]
    %v1638 = vld [vmem:[%s3 + $0x60] sm:$0xf]
    %v1639 = vld [vmem:[%s3 + $0x64] sm:$0xf]
    %v1640 = vld [vmem:[%s3 + $0x68] sm:$0xf]
    %v1641 = vld [vmem:[%s3 + $0x6c] sm:$0xf]
    %v1642 = vld [vmem:[%s3 + $0x70] sm:$0xf]
    %v1643 = vld [vmem:[%s3 + $0x74] sm:$0xf]
    %v1644 = vld [vmem:[%s3 + $0x78] sm:$0xf]
    %v1645 = vld [vmem:[%s3 + $0x7c] sm:$0xf]
    %v1646 = vld [vmem:[%s3 + $0x80] sm:$0xf]
    %v1647 = vld [vmem:[%s3 + $0x84] sm:$0xf]
    %v1648 = vld [vmem:[%s3 + $0x88] sm:$0xf]
    %v1649 = vld [vmem:[%s3 + $0x8c] sm:$0xf]
    %v1650 = vld [vmem:[%s3 + $0x90] sm:$0xf]
    %v1651 = vld [vmem:[%s3 + $0x94] sm:$0xf]
    %v1652 = vld [vmem:[%s3 + $0x98] sm:$0xf]
    %v1653 = vld [vmem:[%s3 + $0x9c] sm:$0xf]
    %v1654 = vld [vmem:[%s3 + $0xa0] sm:$0xf]
    %v1655 = vld [vmem:[%s3 + $0xa4] sm:$0xf]
    %v1656 = vld [vmem:[%s3 + $0xa8] sm:$0xf]
    %v1657 = vld [vmem:[%s3 + $0xac] sm:$0xf]
    %v1658 = vld [vmem:[%s3 + $0xb0] sm:$0xf]
    %v1659 = vld [vmem:[%s3 + $0xb4] sm:$0xf]
    %v1660 = vld [vmem:[%s3 + $0xb8] sm:$0xf]
    %v1661 = vld [vmem:[%s3 + $0xbc] sm:$0xf]
    %v1662 = vld [vmem:[%s3 + $0xc0] sm:$0xf]
    %v1663 = vld [vmem:[%s3 + $0xc4] sm:$0xf]
    %v1664 = vld [vmem:[%s3 + $0xc8] sm:$0xf]
    %v1665 = vld [vmem:[%s3 + $0xcc] sm:$0xf]
    %v1666 = vld [vmem:[%s3 + $0xd0] sm:$0xf]
    %v1667 = vld [vmem:[%s3 + $0xd4] sm:$0xf]
    %v1668 = vld [vmem:[%s3 + $0xd8] sm:$0xf]
    %v1669 = vld [vmem:[%s3 + $0xdc] sm:$0xf]
    %v1670 = vld [vmem:[%s3 + $0xe0] sm:$0xf]
    %v1671 = vld [vmem:[%s3 + $0xe4] sm:$0xf]
    %v1672 = vld [vmem:[%s3 + $0xe8] sm:$0xf]
    %v1673 = vld [vmem:[%s3 + $0xec] sm:$0xf]
    %v1674 = vld [vmem:[%s3 + $0xf0] sm:$0xf]
    %v1675 = vld [vmem:[%s3 + $0xf4] sm:$0xf]
    %v1676 = vld [vmem:[%s3 + $0xf8] sm:$0xf]
    %v1677 = vld [vmem:[%s3 + $0xfc] sm:$0xf]
    %v1678 = vld [vmem:[%s4] sm:$0x1]
    %v1680 = vlaneseq
    %v1681 = vshrl.u32 %v1680, 7
    %v1682 = vsub.s32 0, %v1681
    %v1683 = vrot.slane %v1678, %v1682
    %v1749 = vunpack.c.l.b16 %v1614
    %v1750 = vunpack.c.l.b16 %v1615
    %v1751 = vunpack.c.l.b16 %v1616
    %v1752 = vunpack.c.l.b16 %v1617
    %v1753 = vunpack.c.l.b16 %v1618
    %v1754 = vunpack.c.l.b16 %v1619
    %v1755 = vunpack.c.l.b16 %v1620
    %v1756 = vunpack.c.l.b16 %v1621
    %v1757 = vunpack.c.l.b16 %v1622
    %v1758 = vunpack.c.l.b16 %v1623
    %v1759 = vunpack.c.l.b16 %v1624
    %v1760 = vunpack.c.l.b16 %v1625
    %v1761 = vunpack.c.l.b16 %v1626
    %v1762 = vunpack.c.l.b16 %v1627
    %v1763 = vunpack.c.l.b16 %v1628
    %v1764 = vunpack.c.l.b16 %v1629
    %v1765 = vunpack.c.l.b16 %v1630
    %v1766 = vunpack.c.l.b16 %v1631
    %v1767 = vunpack.c.l.b16 %v1632
    %v1768 = vunpack.c.l.b16 %v1633
    %v1769 = vunpack.c.l.b16 %v1634
    %v1770 = vunpack.c.l.b16 %v1635
    %v1771 = vunpack.c.l.b16 %v1636
    %v1772 = vunpack.c.l.b16 %v1637
    %v1773 = vunpack.c.l.b16 %v1638
    %v1774 = vunpack.c.l.b16 %v1639
    %v1775 = vunpack.c.l.b16 %v1640
    %v1776 = vunpack.c.l.b16 %v1641
    %v1777 = vunpack.c.l.b16 %v1642
    %v1778 = vunpack.c.l.b16 %v1643
    %v1779 = vunpack.c.l.b16 %v1644
    %v1780 = vunpack.c.l.b16 %v1645
    %v1781 = vunpack.c.l.b16 %v1646
    %v1782 = vunpack.c.l.b16 %v1647
    %v1783 = vunpack.c.l.b16 %v1648
    %v1784 = vunpack.c.l.b16 %v1649
    %v1785 = vunpack.c.l.b16 %v1650
    %v1786 = vunpack.c.l.b16 %v1651
    %v1787 = vunpack.c.l.b16 %v1652
    %v1788 = vunpack.c.l.b16 %v1653
    %v1789 = vunpack.c.l.b16 %v1654
    %v1790 = vunpack.c.l.b16 %v1655
    %v1791 = vunpack.c.l.b16 %v1656
    %v1792 = vunpack.c.l.b16 %v1657
    %v1793 = vunpack.c.l.b16 %v1658
    %v1794 = vunpack.c.l.b16 %v1659
    %v1795 = vunpack.c.l.b16 %v1660
    %v1796 = vunpack.c.l.b16 %v1661
    %v1797 = vunpack.c.l.b16 %v1662
    %v1798 = vunpack.c.l.b16 %v1663
    %v1799 = vunpack.c.l.b16 %v1664
    %v1800 = vunpack.c.l.b16 %v1665
    %v1801 = vunpack.c.l.b16 %v1666
    %v1802 = vunpack.c.l.b16 %v1667
    %v1803 = vunpack.c.l.b16 %v1668
    %v1804 = vunpack.c.l.b16 %v1669
    %v1805 = vunpack.c.l.b16 %v1670
    %v1806 = vunpack.c.l.b16 %v1671
    %v1807 = vunpack.c.l.b16 %v1672
    %v1808 = vunpack.c.l.b16 %v1673
    %v1809 = vunpack.c.l.b16 %v1674
    %v1810 = vunpack.c.l.b16 %v1675
    %v1811 = vunpack.c.l.b16 %v1676
    %v1812 = vunpack.c.l.b16 %v1677
    %v1813 = vpack.c.b16 %v1750, %v1749
    %v1814 = vpack.c.b16 %v1752, %v1751
    %v1815 = vpack.c.b16 %v1754, %v1753
    %v1816 = vpack.c.b16 %v1756, %v1755
    %v1817 = vpack.c.b16 %v1758, %v1757
    %v1818 = vpack.c.b16 %v1760, %v1759
    %v1819 = vpack.c.b16 %v1762, %v1761
    %v1820 = vpack.c.b16 %v1764, %v1763
    %v1821 = vpack.c.b16 %v1766, %v1765
    %v1822 = vpack.c.b16 %v1768, %v1767
    %v1823 = vpack.c.b16 %v1770, %v1769
    %v1824 = vpack.c.b16 %v1772, %v1771
    %v1825 = vpack.c.b16 %v1774, %v1773
    %v1826 = vpack.c.b16 %v1776, %v1775
    %v1827 = vpack.c.b16 %v1778, %v1777
    %v1828 = vpack.c.b16 %v1780, %v1779
    %v1829 = vpack.c.b16 %v1782, %v1781
    %v1830 = vpack.c.b16 %v1784, %v1783
    %v1831 = vpack.c.b16 %v1786, %v1785
    %v1832 = vpack.c.b16 %v1788, %v1787
    %v1833 = vpack.c.b16 %v1790, %v1789
    %v1834 = vpack.c.b16 %v1792, %v1791
    %v1835 = vpack.c.b16 %v1794, %v1793
    %v1836 = vpack.c.b16 %v1796, %v1795
    %v1837 = vpack.c.b16 %v1798, %v1797
    %v1838 = vpack.c.b16 %v1800, %v1799
    %v1839 = vpack.c.b16 %v1802, %v1801
    %v1840 = vpack.c.b16 %v1804, %v1803
    %v1841 = vpack.c.b16 %v1806, %v1805
    %v1842 = vpack.c.b16 %v1808, %v1807
    %v1843 = vpack.c.b16 %v1810, %v1809
    %v1844 = vpack.c.b16 %v1812, %v1811
    %1877 = vmatprep.subr.bf16.mxu0 0
    %1878 = vmatpush1.bf16.msra.mxu0 %v1820
    %1879 = vmatprep.subr.bf16.mxu0 0
    %1880 = vmatpush1.bf16.msra.mxu0 %v1819
    %1881 = vmatprep.subr.bf16.mxu0 0
    %1882 = vmatpush1.bf16.msra.mxu0 %v1818
    %1883 = vmatprep.subr.bf16.mxu0 0
    %1884 = vmatpush1.bf16.msra.mxu0 %v1817
    %1885 = vmatprep.subr.bf16.mxu0 0
    %1886 = vmatpush1.bf16.msra.mxu0 %v1816
    %1887 = vmatprep.subr.bf16.mxu0 0
    %1888 = vmatpush1.bf16.msra.mxu0 %v1815
    %1889 = vmatprep.subr.bf16.mxu0 0
    %1890 = vmatpush1.bf16.msra.mxu0 %v1814
    %1891 = vmatprep.subr.bf16.mxu0 0
    %1892 = vmatpush1.bf16.msra.mxu0 %v1813
    %1893 = vmatprep.subr.bf16.mxu0 0
    %1894 = vmatpush2.bf16.msra.mxu0 %v1828
    %1895 = vmatprep.subr.bf16.mxu0 0
    %1896 = vmatpush2.bf16.msra.mxu0 %v1827
    %1897 = vmatprep.subr.bf16.mxu0 0
    %1898 = vmatpush2.bf16.msra.mxu0 %v1826
    %1899 = vmatprep.subr.bf16.mxu0 0
    %1900 = vmatpush2.bf16.msra.mxu0 %v1825
    %1901 = vmatprep.subr.bf16.mxu0 0
    %1902 = vmatpush2.bf16.msra.mxu0 %v1824
    %1903 = vmatprep.subr.bf16.mxu0 0
    %1904 = vmatpush2.bf16.msra.mxu0 %v1823
    %1905 = vmatprep.subr.bf16.mxu0 0
    %1906 = vmatpush2.bf16.msra.mxu0 %v1822
    %1907 = vmatprep.subr.bf16.mxu0 0
    %1908 = vmatpush2.bf16.msra.mxu0 %v1821
    %1909 = vmatprep.mubr.bf16.mxu0 %v1611
    %1910 = vmatmul.mubr.bf16.gmra.mxu0 %v1610
    %v1911 = vpop.f32.mrf.mxu0
    %v1912 = vadd.f32 %v1683, %v1911
    %v1913 = vpop.f32.mrf.mxu0
    %v1914 = vpop.f32.mrf.mxu0
    %v1915 = vadd.f32 %v1683, %v1914
    %v1916 = vpop.f32.mrf.mxu0
    %1917 = vdwg.mxu0
    %1918 = vmatprep.subr.bf16.mxu0 0
    %1919 = vmatpush1.bf16.msra.mxu0 %v1836
    %1920 = vmatprep.subr.bf16.mxu0 0
    %1921 = vmatpush1.bf16.msra.mxu0 %v1835
    %1922 = vmatprep.subr.bf16.mxu0 0
    %1923 = vmatpush1.bf16.msra.mxu0 %v1834
    %1924 = vmatprep.subr.bf16.mxu0 0
    %1925 = vmatpush1.bf16.msra.mxu0 %v1833
    %1926 = vmatprep.subr.bf16.mxu0 0
    %1927 = vmatpush1.bf16.msra.mxu0 %v1832
    %1928 = vmatprep.subr.bf16.mxu0 0
    %1929 = vmatpush1.bf16.msra.mxu0 %v1831
    %1930 = vmatprep.subr.bf16.mxu0 0
    %1931 = vmatpush1.bf16.msra.mxu0 %v1830
    %1932 = vmatprep.subr.bf16.mxu0 0
    %1933 = vmatpush1.bf16.msra.mxu0 %v1829
    %1934 = vmatprep.subr.bf16.mxu0 0
    %1935 = vmatpush2.bf16.msra.mxu0 %v1844
    %1936 = vmatprep.subr.bf16.mxu0 0
    %1937 = vmatpush2.bf16.msra.mxu0 %v1843
    %1938 = vmatprep.subr.bf16.mxu0 0
    %1939 = vmatpush2.bf16.msra.mxu0 %v1842
    %1940 = vmatprep.subr.bf16.mxu0 0
    %1941 = vmatpush2.bf16.msra.mxu0 %v1841
    %1942 = vmatprep.subr.bf16.mxu0 0
    %1943 = vmatpush2.bf16.msra.mxu0 %v1840
    %1944 = vmatprep.subr.bf16.mxu0 0
    %1945 = vmatpush2.bf16.msra.mxu0 %v1839
    %1946 = vmatprep.subr.bf16.mxu0 0
    %1947 = vmatpush2.bf16.msra.mxu0 %v1838
    %1948 = vmatprep.subr.bf16.mxu0 0
    %1949 = vmatpush2.bf16.msra.mxu0 %v1837
    %1950 = vmatprep.mubr.bf16.mxu0 %v1613
    %1951 = vmatmul.mubr.bf16.gmra.mxu0 %v1612
    %v1952 = vpop.f32.mrf.mxu0
    %v1953 = vadd.f32 %v1912, %v1952
    %v1954 = vpop.f32.mrf.mxu0
    %v1955 = vpop.f32.mrf.mxu0
    %v1956 = vadd.f32 %v1915, %v1955
    %v1957 = vpop.f32.mrf.mxu0
    %1958 = vdwg.mxu0
    %vm1959 = vcmask 80896
    %v1960 = vsel %vm1959, %v1953, -inf
    %1961 = vmax.xlane.f32.xlu0 %v1960
    %v1962 = vpop.xlane.xlu0 %1961
    %v1963 = vsel %vm1959, %v1956, -inf
    %1964 = vmax.xlane.f32.xlu0 %v1963
    %v1965 = vpop.xlane.xlu0 %1964
    %v1966 = vsub.f32 %v1953, %v1962
    %v1967 = vsub.f32 %v1956, %v1965
    %v1968 = vmul.f32 %v1966, 1.442695
    %v1969 = vpow.pop %v1968
    %v1970 = vmul.f32 %v1967, 1.442695
    %v1971 = vpow.pop %v1970
    %v1972 = vsel %vm1959, %v1969, 0.0
    %1973 = vadd.xlane.f32.xlu0 %v1972
    %v1974 = vpop.xlane.xlu0 %1973
    %v1975 = vsel %vm1959, %v1971, 0.0
    %1976 = vadd.xlane.f32.xlu0 %v1975
    %v1977 = vpop.xlane.xlu0 %1976
    %v1978 = vlog2.pop %v1974
    %v1979 = vmul.f32 %v1978, 0.6931472
    %v1980 = vlog2.pop %v1977
    %v1981 = vmul.f32 %v1980, 0.6931472
    %v1982 = vsub.f32 %v1966, %v1979
    %v1983 = vsub.f32 %v1967, %v1981
    %1984 = vst.msk [vmem:[%s5] sm:$0xff] %vm1959, %v1982
    %1985 = vst.msk [vmem:[%s5 + $0x8] sm:$0xff] %vm1959, %v1983
    // Predicated region
    $region26: #{full_connect_forward.1} parent=1 // pred_check
      _
    $region27: #{full_connect_forward.1} parent=1 // pred_check_branch
      %1987 = sbr.rel (0) target = $region29
    $region28: #{full_connect_forward.1} parent=1 // pred_region
      _
    $region29: #{full_connect_forward.1} parent=1 // pred_fallthru
      _
    // Predicated region
    $region30: #{full_connect_forward.1} parent=1 // pred_check
      _
    $region31: #{full_connect_forward.1} parent=1 // pred_check_branch
      %1989 = sbr.rel (0) target = $region33
    $region32: #{full_connect_forward.1} parent=1 // pred_region
      _
    $region33: #{full_connect_forward.1} parent=1 // pred_fallthru
      _
    %1990 = vsyncpa [#allocation3], 1

</llo_original>
